<compile_context>
chip_gen: v6e
topology: v6e:2x2x1
jax: 0.10.0
libtpu: 0.0.40
codegen_flags: <defaults>
</compile_context>

<pallas_src>
import functools

import jax
import jax.numpy as jnp
from jax.experimental import pallas as pl
from jax.experimental.pallas import tpu as pltpu


OCP = 128                       # padded output-lane width (128 = v5e MXU width)
FC_IN = 512                     # fc1 input features padded 400 -> 512
VMEM_LIMIT = 32 * 1024 * 1024   # explicit scoped-VMEM budget (safe on v7x 64 MiB)


def _round_up(x, m):
    return (x + m - 1) // m * m


def _pick_batch_block(n, cap):
    """Images per conv grid step: keep >=2 steps when n>=2, cap for VMEM."""
    if n <= 1:
        return 1
    return max(1, min(cap, n // 2))


def _pick_fc_block(n):
    """FC row-block: multiple of 16 (bf16 sublane pack), capped at 128."""
    n16 = _round_up(max(n, 1), 16)
    return min(128, _round_up(max(n16 // 2, 16), 16))


# ----------------------------- Pallas kernels ------------------------------

def _conv_relu_pool_kernel(p_ref, w_ref, b_ref, o_ref):
    """Fused im2col-conv matmul + 2x2 maxpool + bias + ReLU for Bt images.

    p_ref: (Bt, 4*Qp, KKC) bf16 — quarter-major patch rows (pool slot d at
           rows [d*Qp, (d+1)*Qp), ordered by pooled pixel).
    w_ref: (KKC, OCP) bf16 weight, zero-padded to 128 output lanes.
    b_ref: (1, OCP)   f32 bias, zero-padded.
    o_ref: (Bt, Qp, OCP) bf16 pooled, biased, ReLU'd output (lane-dense).
    """
    bt, qp, ocp = o_ref.shape
    kkc = p_ref.shape[-1]

    # One long MXU stream: (Bt*4*Qp, KKC) @ (KKC, 128) -> f32.
    y = jnp.dot(p_ref[...].reshape(bt * 4 * qp, kkc), w_ref[...],
                preferred_element_type=jnp.float32)
    y4 = y.reshape(bt, 4, qp, ocp)

    # Running-fold 2x2 max-pool over the 4 quarters (caps live temps at 2).
    acc = y4[:, 0]
    acc = jnp.maximum(acc, y4[:, 1])
    acc = jnp.maximum(acc, y4[:, 2])
    acc = jnp.maximum(acc, y4[:, 3])
    # bias + ReLU commute with the max -> apply once, after pooling.
    acc = jnp.maximum(acc + b_ref[...], 0.0)
    o_ref[...] = acc.astype(o_ref.dtype)


def _fc_softmax_kernel(x_ref, w1_ref, b1_ref, w2_ref, b2_ref, w3_ref, b3_ref,
                       o_ref, *, n_classes):
    """fc1+ReLU -> fc2+ReLU -> out -> softmax on one row-block of the batch.

    All widths padded to 128 lanes; padded lanes carry exact zeros through the
    ReLU layers (zero-padded weight columns / bias) and are masked to -inf
    before the softmax.  Weights are bf16; accumulation and softmax are f32.
    """
    h = jnp.dot(x_ref[...], w1_ref[...], preferred_element_type=jnp.float32)
    h = jnp.maximum(h + b1_ref[...], 0.0).astype(w2_ref.dtype)
    h = jnp.dot(h, w2_ref[...], preferred_element_type=jnp.float32)
    h = jnp.maximum(h + b2_ref[...], 0.0).astype(w3_ref.dtype)
    logits = jnp.dot(h, w3_ref[...], preferred_element_type=jnp.float32)
    logits = logits + b3_ref[...]

    lane = jax.lax.broadcasted_iota(jnp.int32, logits.shape, 1)
    logits = jnp.where(lane < n_classes, logits, jnp.float32(-1e30))
    m = jnp.max(logits, axis=-1, keepdims=True)
    e = jnp.exp(logits - m)
    s = jnp.sum(e, axis=-1, keepdims=True)
    o_ref[...] = (e / s).astype(o_ref.dtype)      # exact division (parity)


# ------------------------------ host wrappers ------------------------------

def _im2col_pool_quarters(x, k, pad):
    """NHWC -> (N, 4*Qp, K*K*C) bf16 patch matrix grouped by 2x2 pool slot.

    Column order (kh, kw, c).  Rows are quarter-major: rows [d*Qp, (d+1)*Qp)
    hold the patches of conv pixels at pool-window offset d = (dy, dx),
    ordered by pooled pixel (ph, pw); rows Q..Qp-1 are zero padding so Qp is
    a multiple of 16 (tile-aligned in-kernel reshapes).
    """
    if pad:
        x = jnp.pad(x, ((0, 0), (pad, pad), (pad, pad), (0, 0)))
    n, hp, wp, c = x.shape
    oh, ow = hp - k + 1, wp - k + 1
    cols = [x[:, i:i + oh, j:j + ow, :] for i in range(k) for j in range(k)]
    patches = jnp.concatenate(cols, axis=-1)            # (N, OH, OW, K*K*C)
    ph, pw = oh // 2, ow // 2
    q = ph * pw
    qp = _round_up(q, 16)
    quarters = [patches[:, dy::2, dx::2, :].reshape(n, q, k * k * c)
                for dy in (0, 1) for dx in (0, 1)]
    stacked = jnp.stack(quarters, axis=1)               # (N, 4, Q, KKC)
    stacked = jnp.pad(stacked, ((0, 0), (0, 0), (0, qp - q), (0, 0)))
    out = stacked.reshape(n, 4 * qp, k * k * c).astype(jnp.bfloat16)
    return out, ph, pw, qp


def conv_relu_pool(x_nhwc, w, b, pad, *, bt_cap=8):
    """Conv2Linear + ReLU + MaxPool2d(2), NHWC in / NHWC out, fused kernel."""
    oc, c, kh, kw = w.shape
    n = x_nhwc.shape[0]
    kkc = kh * kw * c

    # TODO(synk): in-kernel im2col (shifted views of a resident NHWC tile)
    # would remove this ~K*K HBM inflation; kept host-side for lowering safety.
    patches, ph, pw, qp = _im2col_pool_quarters(x_nhwc, kh, pad)
    q = ph * pw

    bt = _pick_batch_block(n, bt_cap)
    n_pad = _round_up(n, bt)
    if n_pad != n:
        patches = jnp.pad(patches, ((0, n_pad - n), (0, 0), (0, 0)))

    # (OC, C, KH, KW) -> (KH*KW*C, OC), zero-padded to 128 lanes, bf16.
    wm = jnp.pad(w.transpose(2, 3, 1, 0).reshape(kkc, oc),
                 ((0, 0), (0, OCP - oc))).astype(jnp.bfloat16)
    bm = jnp.pad(b.astype(jnp.float32), (0, OCP - oc)).reshape(1, OCP)

    out = pl.pallas_call(
        _conv_relu_pool_kernel,
        out_shape=jax.ShapeDtypeStruct((n_pad, qp, OCP), jnp.bfloat16),
        grid=(n_pad // bt,),
        in_specs=[
            pl.BlockSpec((bt, 4 * qp, kkc), lambda i: (i, 0, 0)),
            pl.BlockSpec((kkc, OCP), lambda i: (0, 0)),
            pl.BlockSpec((1, OCP), lambda i: (0, 0)),
        ],
        out_specs=pl.BlockSpec((bt, qp, OCP), lambda i: (i, 0, 0)),
        compiler_params=pltpu.CompilerParams(
            dimension_semantics=("parallel",),
            vmem_limit_bytes=VMEM_LIMIT),
    )(patches, wm, bm)

    # stay channels-last (bf16) between layers; drop row/lane padding once.
    return out[:n, :q, :oc].reshape(n, ph, pw, oc)


def fc_head(x_flat, params):
    """Fused Flatten -> fc1+ReLU -> fc2+ReLU -> out -> Softmax, batch-gridded."""
    n, feat = x_flat.shape                                # feat = 400

    # fc1 expects torch NCHW-flatten order (c, h, w); activation is NHWC
    # flattened (h, w, c) -> permute the fc1 weight columns instead.
    w1 = params["fc1_w"].reshape(120, 16, 5, 5).transpose(0, 2, 3, 1)
    w1 = w1.reshape(120, 400).T                                   # (400, 120)
    w1 = jnp.pad(w1, ((0, FC_IN - 400), (0, OCP - 120))).astype(jnp.bfloat16)
    b1 = jnp.pad(params["fc1_b"], (0, OCP - 120)).reshape(1, OCP)
    w2 = jnp.pad(params["fc2_w"].T,
                 ((0, OCP - 120), (0, OCP - 84))).astype(jnp.bfloat16)
    b2 = jnp.pad(params["fc2_b"], (0, OCP - 84)).reshape(1, OCP)
    w3 = jnp.pad(params["out_w"].T,
                 ((0, OCP - 84), (0, OCP - 10))).astype(jnp.bfloat16)
    b3 = jnp.pad(params["out_b"], (0, OCP - 10)).reshape(1, OCP)

    bm = _pick_fc_block(n)
    n_pad = _round_up(n, bm)
    x = jnp.pad(x_flat.astype(jnp.bfloat16),
                ((0, n_pad - n), (0, FC_IN - feat)))

    kern = functools.partial(_fc_softmax_kernel, n_classes=10)
    out = pl.pallas_call(
        kern,
        out_shape=jax.ShapeDtypeStruct((n_pad, OCP), jnp.float32),
        grid=(n_pad // bm,),
        in_specs=[
            pl.BlockSpec((bm, FC_IN), lambda i: (i, 0)),
            pl.BlockSpec((FC_IN, OCP), lambda i: (0, 0)),
            pl.BlockSpec((1, OCP), lambda i: (0, 0)),
            pl.BlockSpec((OCP, OCP), lambda i: (0, 0)),
            pl.BlockSpec((1, OCP), lambda i: (0, 0)),
            pl.BlockSpec((OCP, OCP), lambda i: (0, 0)),
            pl.BlockSpec((1, OCP), lambda i: (0, 0)),
        ],
        out_specs=pl.BlockSpec((bm, OCP), lambda i: (i, 0)),
        compiler_params=pltpu.CompilerParams(
            dimension_semantics=("parallel",),
            vmem_limit_bytes=VMEM_LIMIT),
    )(x, w1, b1, w2, b2, w3, b3)
    return out[:n, :10]


def init_params(key):
    keys = jax.random.split(key, 10)

    def u(k, shape, fan_in):
        bound = 1.0 / jnp.sqrt(float(fan_in))
        return jax.random.uniform(k, shape, jnp.float32, -bound, bound)

    return {
        "conv1_w": u(keys[0], (6, 1, 5, 5), 1 * 5 * 5),
        "conv1_b": u(keys[1], (6,), 1 * 5 * 5),
        "conv2_w": u(keys[2], (16, 6, 5, 5), 6 * 5 * 5),
        "conv2_b": u(keys[3], (16,), 6 * 5 * 5),
        "fc1_w": u(keys[4], (120, 400), 400),
        "fc1_b": u(keys[5], (120,), 400),
        "fc2_w": u(keys[6], (84, 120), 120),
        "fc2_b": u(keys[7], (84,), 120),
        "out_w": u(keys[8], (10, 84), 84),
        "out_b": u(keys[9], (10,), 84),
    }


@jax.jit
def lenet_forward(params, x):
    # x arrives NCHW (PyTorch convention); go channels-last once, stay NHWC.
    x = x.transpose(0, 2, 3, 1)                                  # (N, 28, 28, 1)
    # conv1: Conv2Linear(1->6, k=5, pad=2) + ReLU + MaxPool2d(2): 28 -> 14
    x = conv_relu_pool(x, params["conv1_w"], params["conv1_b"], pad=2, bt_cap=8)
    # conv2: Conv2Linear(6->16, k=5) + ReLU + MaxPool2d(2): 14 -> 5
    x = conv_relu_pool(x, params["conv2_w"], params["conv2_b"], pad=0, bt_cap=32)
    # fc: Flatten -> 120 -> 84 -> 10 -> Softmax (single fused, batch-gridded)
    # TODO(synk): fusing conv2 + FC head into one pallas_call would also drop
    # this HBM round-trip of the tiny (N,5,5,16) activation.
    n = x.shape[0]
    x_flat = x.reshape(n, 5 * 5 * 16)                            # NHWC flatten
    return fc_head(x_flat, params)


if __name__ == "__main__":
    key = jax.random.PRNGKey(0)
    pkey, xkey = jax.random.split(key)
    params = init_params(pkey)
    # LeNet's fc layer requires 16*5*5 = 400 features, which fixes 1x28x28 input.
    x = jax.random.normal(xkey, (2, 1, 28, 28), jnp.float32)
    y = lenet_forward(params, x)
    y = jax.block_until_ready(y)
    assert y.shape == (2, 10)
    assert bool(jnp.all(jnp.isfinite(y)))
    assert bool(jnp.all(y >= 0.0))
    # softmax rows sum to ~1 (exact division in f32)
    assert bool(jnp.allclose(jnp.sum(y, axis=1), 1.0, atol=1e-3))
    print("KERNEL_OK")
</pallas_src>

<mosaic_0001>
module attributes {stable_mosaic.version = 11 : i64} {
  func.func @_conv_relu_pool_kernel(%arg0: i32, %arg1: memref<1x832x25xbf16, #tpu.memory_space<vmem>>, %arg2: memref<25x128xbf16, #tpu.memory_space<vmem>>, %arg3: memref<1x128xf32, #tpu.memory_space<vmem>>, %arg4: memref<1x208x128xbf16, #tpu.memory_space<vmem>>) attributes {dimension_semantics = [#tpu.dimension_semantics<parallel>], iteration_bounds = array<i64: 2>, scalar_prefetch = 0 : i64, scratch_operands = 0 : i64, tpu.core_type = #tpu.core_type<tc>, window_params = [{transform_indices = @transform_0, window_bounds = array<i64: 1, 832, 25>}, {pipeline_mode = #tpu.pipeline_mode<synchronous>, transform_indices = @transform_1, window_bounds = array<i64: 25, 128>}, {pipeline_mode = #tpu.pipeline_mode<synchronous>, transform_indices = @transform_2, window_bounds = array<i64: 1, 128>}, {transform_indices = @transform_3, window_bounds = array<i64: 1, 208, 128>}]} {
    %c0 = arith.constant 0 : index
    %c0_0 = arith.constant 0 : index
    %c0_1 = arith.constant 0 : index
    %0 = vector.load %arg1[%c0, %c0_0, %c0_1] : memref<1x832x25xbf16, #tpu.memory_space<vmem>>, vector<1x832x25xbf16>
    %1 = vector.shape_cast %0 : vector<1x832x25xbf16> to vector<832x25xbf16>
    %c0_2 = arith.constant 0 : index
    %c0_3 = arith.constant 0 : index
    %2 = vector.load %arg2[%c0_2, %c0_3] : memref<25x128xbf16, #tpu.memory_space<vmem>>, vector<25x128xbf16>
    %cst = arith.constant dense<0.000000e+00> : vector<832x128xf32>
    %3 = tpu.matmul %1, %2, %cst {dimension_numbers = #tpu.dot_dimension_numbers<[1], [0], [0], [1], [0, 0, 1, 1], [], []>} : vector<832x25xbf16>, vector<25x128xbf16>, vector<832x128xf32> -> vector<832x128xf32>
    %4 = vector.shape_cast %3 : vector<832x128xf32> to vector<1x4x208x128xf32>
    %5 = vector.extract_strided_slice %4 {offsets = [0, 0, 0, 0], sizes = [1, 1, 208, 128], strides = [1, 1, 1, 1]} : vector<1x4x208x128xf32> to vector<1x1x208x128xf32>
    %6 = vector.shape_cast %5 : vector<1x1x208x128xf32> to vector<1x208x128xf32>
    %7 = vector.extract_strided_slice %4 {offsets = [0, 1, 0, 0], sizes = [1, 1, 208, 128], strides = [1, 1, 1, 1]} : vector<1x4x208x128xf32> to vector<1x1x208x128xf32>
    %8 = vector.shape_cast %7 : vector<1x1x208x128xf32> to vector<1x208x128xf32>
    %9 = arith.maximumf %6, %8 : vector<1x208x128xf32>
    %10 = vector.extract_strided_slice %4 {offsets = [0, 2, 0, 0], sizes = [1, 1, 208, 128], strides = [1, 1, 1, 1]} : vector<1x4x208x128xf32> to vector<1x1x208x128xf32>
    %11 = vector.shape_cast %10 : vector<1x1x208x128xf32> to vector<1x208x128xf32>
    %12 = arith.maximumf %9, %11 : vector<1x208x128xf32>
    %13 = vector.extract_strided_slice %4 {offsets = [0, 3, 0, 0], sizes = [1, 1, 208, 128], strides = [1, 1, 1, 1]} : vector<1x4x208x128xf32> to vector<1x1x208x128xf32>
    %14 = vector.shape_cast %13 : vector<1x1x208x128xf32> to vector<1x208x128xf32>
    %15 = arith.maximumf %12, %14 : vector<1x208x128xf32>
    %c0_4 = arith.constant 0 : index
    %c0_5 = arith.constant 0 : index
    %16 = vector.load %arg3[%c0_4, %c0_5] : memref<1x128xf32, #tpu.memory_space<vmem>>, vector<1x128xf32>
    %17 = vector.shape_cast %16 : vector<1x128xf32> to vector<1x1x128xf32>
    %18 = vector.broadcast %17 : vector<1x1x128xf32> to vector<1x208x128xf32>
    %19 = arith.addf %15, %18 : vector<1x208x128xf32>
    %cst_6 = arith.constant 0.000000e+00 : f32
    %20 = vector.broadcast %cst_6 : f32 to vector<1x208x128xf32>
    %21 = arith.maximumf %19, %20 : vector<1x208x128xf32>
    %22 = arith.truncf %21 : vector<1x208x128xf32> to vector<1x208x128xbf16>
    %c0_7 = arith.constant 0 : index
    %c0_8 = arith.constant 0 : index
    %c0_9 = arith.constant 0 : index
    %23 = vector.load %arg4[%c0_7, %c0_8, %c0_9] : memref<1x208x128xbf16, #tpu.memory_space<vmem>>, vector<1x208x128xbf16>
    tpu.vector_store %arg4[%c0_7, %c0_8, %c0_9], %22 {strides = array<i32>} : memref<1x208x128xbf16, #tpu.memory_space<vmem>>, vector<1x208x128xbf16>,
    return
  }
  func.func @transform_0(%arg0: i32) -> (i32, i32, i32) {
    %c0_i32 = arith.constant 0 : i32
    %c0_i32_0 = arith.constant 0 : i32
    %c0_i32_1 = arith.constant 0 : i32
    return %arg0, %c0_i32, %c0_i32_0 : i32, i32, i32
  }
  func.func @transform_1(%arg0: i32) -> (i32, i32) {
    %c0_i32 = arith.constant 0 : i32
    %c0_i32_0 = arith.constant 0 : i32
    %c0_i32_1 = arith.constant 0 : i32
    return %c0_i32, %c0_i32_0 : i32, i32
  }
  func.func @transform_2(%arg0: i32) -> (i32, i32) {
    %c0_i32 = arith.constant 0 : i32
    %c0_i32_0 = arith.constant 0 : i32
    %c0_i32_1 = arith.constant 0 : i32
    return %c0_i32, %c0_i32_0 : i32, i32
  }
  func.func @transform_3(%arg0: i32) -> (i32, i32, i32) {
    %c0_i32 = arith.constant 0 : i32
    %c0_i32_0 = arith.constant 0 : i32
    %c0_i32_1 = arith.constant 0 : i32
    return %arg0, %c0_i32, %c0_i32_0 : i32, i32, i32
  }
}

module attributes {stable_mosaic.version = 11 : i64} {
  func.func @_conv_relu_pool_kernel(%arg0: i32, %arg1: memref<1x128x150xbf16, #tpu.memory_space<vmem>>, %arg2: memref<150x128xbf16, #tpu.memory_space<vmem>>, %arg3: memref<1x128xf32, #tpu.memory_space<vmem>>, %arg4: memref<1x32x128xbf16, #tpu.memory_space<vmem>>) attributes {dimension_semantics = [#tpu.dimension_semantics<parallel>], iteration_bounds = array<i64: 2>, scalar_prefetch = 0 : i64, scratch_operands = 0 : i64, tpu.core_type = #tpu.core_type<tc>, window_params = [{transform_indices = @transform_0, window_bounds = array<i64: 1, 128, 150>}, {pipeline_mode = #tpu.pipeline_mode<synchronous>, transform_indices = @transform_1, window_bounds = array<i64: 150, 128>}, {pipeline_mode = #tpu.pipeline_mode<synchronous>, transform_indices = @transform_2, window_bounds = array<i64: 1, 128>}, {transform_indices = @transform_3, window_bounds = array<i64: 1, 32, 128>}]} {
    %c0 = arith.constant 0 : index
    %c0_0 = arith.constant 0 : index
    %c0_1 = arith.constant 0 : index
    %0 = vector.load %arg1[%c0, %c0_0, %c0_1] : memref<1x128x150xbf16, #tpu.memory_space<vmem>>, vector<1x128x150xbf16>
    %1 = vector.shape_cast %0 : vector<1x128x150xbf16> to vector<128x150xbf16>
    %c0_2 = arith.constant 0 : index
    %c0_3 = arith.constant 0 : index
    %2 = vector.load %arg2[%c0_2, %c0_3] : memref<150x128xbf16, #tpu.memory_space<vmem>>, vector<150x128xbf16>
    %cst = arith.constant dense<0.000000e+00> : vector<128x128xf32>
    %3 = tpu.matmul %1, %2, %cst {dimension_numbers = #tpu.dot_dimension_numbers<[1], [0], [0], [1], [0, 0, 1, 1], [], []>} : vector<128x150xbf16>, vector<150x128xbf16>, vector<128x128xf32> -> vector<128x128xf32>
    %4 = vector.shape_cast %3 : vector<128x128xf32> to vector<1x4x32x128xf32>
    %5 = vector.extract_strided_slice %4 {offsets = [0, 0, 0, 0], sizes = [1, 1, 32, 128], strides = [1, 1, 1, 1]} : vector<1x4x32x128xf32> to vector<1x1x32x128xf32>
    %6 = vector.shape_cast %5 : vector<1x1x32x128xf32> to vector<1x32x128xf32>
    %7 = vector.extract_strided_slice %4 {offsets = [0, 1, 0, 0], sizes = [1, 1, 32, 128], strides = [1, 1, 1, 1]} : vector<1x4x32x128xf32> to vector<1x1x32x128xf32>
    %8 = vector.shape_cast %7 : vector<1x1x32x128xf32> to vector<1x32x128xf32>
    %9 = arith.maximumf %6, %8 : vector<1x32x128xf32>
    %10 = vector.extract_strided_slice %4 {offsets = [0, 2, 0, 0], sizes = [1, 1, 32, 128], strides = [1, 1, 1, 1]} : vector<1x4x32x128xf32> to vector<1x1x32x128xf32>
    %11 = vector.shape_cast %10 : vector<1x1x32x128xf32> to vector<1x32x128xf32>
    %12 = arith.maximumf %9, %11 : vector<1x32x128xf32>
    %13 = vector.extract_strided_slice %4 {offsets = [0, 3, 0, 0], sizes = [1, 1, 32, 128], strides = [1, 1, 1, 1]} : vector<1x4x32x128xf32> to vector<1x1x32x128xf32>
    %14 = vector.shape_cast %13 : vector<1x1x32x128xf32> to vector<1x32x128xf32>
    %15 = arith.maximumf %12, %14 : vector<1x32x128xf32>
    %c0_4 = arith.constant 0 : index
    %c0_5 = arith.constant 0 : index
    %16 = vector.load %arg3[%c0_4, %c0_5] : memref<1x128xf32, #tpu.memory_space<vmem>>, vector<1x128xf32>
    %17 = vector.shape_cast %16 : vector<1x128xf32> to vector<1x1x128xf32>
    %18 = vector.broadcast %17 : vector<1x1x128xf32> to vector<1x32x128xf32>
    %19 = arith.addf %15, %18 : vector<1x32x128xf32>
    %cst_6 = arith.constant 0.000000e+00 : f32
    %20 = vector.broadcast %cst_6 : f32 to vector<1x32x128xf32>
    %21 = arith.maximumf %19, %20 : vector<1x32x128xf32>
    %22 = arith.truncf %21 : vector<1x32x128xf32> to vector<1x32x128xbf16>
    %c0_7 = arith.constant 0 : index
    %c0_8 = arith.constant 0 : index
    %c0_9 = arith.constant 0 : index
    %23 = vector.load %arg4[%c0_7, %c0_8, %c0_9] : memref<1x32x128xbf16, #tpu.memory_space<vmem>>, vector<1x32x128xbf16>
    tpu.vector_store %arg4[%c0_7, %c0_8, %c0_9], %22 {strides = array<i32>} : memref<1x32x128xbf16, #tpu.memory_space<vmem>>, vector<1x32x128xbf16>,
    return
  }
  func.func @transform_0(%arg0: i32) -> (i32, i32, i32) {
    %c0_i32 = arith.constant 0 : i32
    %c0_i32_0 = arith.constant 0 : i32
    %c0_i32_1 = arith.constant 0 : i32
    return %arg0, %c0_i32, %c0_i32_0 : i32, i32, i32
  }
  func.func @transform_1(%arg0: i32) -> (i32, i32) {
    %c0_i32 = arith.constant 0 : i32
    %c0_i32_0 = arith.constant 0 : i32
    %c0_i32_1 = arith.constant 0 : i32
    return %c0_i32, %c0_i32_0 : i32, i32
  }
  func.func @transform_2(%arg0: i32) -> (i32, i32) {
    %c0_i32 = arith.constant 0 : i32
    %c0_i32_0 = arith.constant 0 : i32
    %c0_i32_1 = arith.constant 0 : i32
    return %c0_i32, %c0_i32_0 : i32, i32
  }
  func.func @transform_3(%arg0: i32) -> (i32, i32, i32) {
    %c0_i32 = arith.constant 0 : i32
    %c0_i32_0 = arith.constant 0 : i32
    %c0_i32_1 = arith.constant 0 : i32
    return %arg0, %c0_i32, %c0_i32_0 : i32, i32, i32
  }
}

module attributes {stable_mosaic.version = 11 : i64} {
  func.func @_fc_softmax_kernel(%arg0: i32, %arg1: memref<16x512xbf16, #tpu.memory_space<vmem>>, %arg2: memref<512x128xbf16, #tpu.memory_space<vmem>>, %arg3: memref<1x128xf32, #tpu.memory_space<vmem>>, %arg4: memref<128x128xbf16, #tpu.memory_space<vmem>>, %arg5: memref<1x128xf32, #tpu.memory_space<vmem>>, %arg6: memref<128x128xbf16, #tpu.memory_space<vmem>>, %arg7: memref<1x128xf32, #tpu.memory_space<vmem>>, %arg8: memref<16x128xf32, #tpu.memory_space<vmem>>) attributes {dimension_semantics = [#tpu.dimension_semantics<parallel>], iteration_bounds = array<i64: 1>, scalar_prefetch = 0 : i64, scratch_operands = 0 : i64, tpu.core_type = #tpu.core_type<tc>, window_params = [{transform_indices = @transform_0, window_bounds = array<i64: 16, 512>}, {pipeline_mode = #tpu.pipeline_mode<synchronous>, transform_indices = @transform_1, window_bounds = array<i64: 512, 128>}, {pipeline_mode = #tpu.pipeline_mode<synchronous>, transform_indices = @transform_2, window_bounds = array<i64: 1, 128>}, {pipeline_mode = #tpu.pipeline_mode<synchronous>, transform_indices = @transform_3, window_bounds = array<i64: 128, 128>}, {pipeline_mode = #tpu.pipeline_mode<synchronous>, transform_indices = @transform_4, window_bounds = array<i64: 1, 128>}, {pipeline_mode = #tpu.pipeline_mode<synchronous>, transform_indices = @transform_5, window_bounds = array<i64: 128, 128>}, {pipeline_mode = #tpu.pipeline_mode<synchronous>, transform_indices = @transform_6, window_bounds = array<i64: 1, 128>}, {transform_indices = @transform_7, window_bounds = array<i64: 16, 128>}]} {
    %c0 = arith.constant 0 : index
    %c0_0 = arith.constant 0 : index
    %0 = vector.load %arg1[%c0, %c0_0] : memref<16x512xbf16, #tpu.memory_space<vmem>>, vector<16x512xbf16>
    %c0_1 = arith.constant 0 : index
    %c0_2 = arith.constant 0 : index
    %1 = vector.load %arg2[%c0_1, %c0_2] : memref<512x128xbf16, #tpu.memory_space<vmem>>, vector<512x128xbf16>
    %cst = arith.constant dense<0.000000e+00> : vector<16x128xf32>
    %2 = tpu.matmul %0, %1, %cst {dimension_numbers = #tpu.dot_dimension_numbers<[1], [0], [0], [1], [0, 0, 1, 1], [], []>} : vector<16x512xbf16>, vector<512x128xbf16>, vector<16x128xf32> -> vector<16x128xf32>
    %c0_3 = arith.constant 0 : index
    %c0_4 = arith.constant 0 : index
    %3 = vector.load %arg3[%c0_3, %c0_4] : memref<1x128xf32, #tpu.memory_space<vmem>>, vector<1x128xf32>
    %4 = vector.broadcast %3 : vector<1x128xf32> to vector<16x128xf32>
    %5 = arith.addf %2, %4 : vector<16x128xf32>
    %cst_5 = arith.constant 0.000000e+00 : f32
    %6 = vector.broadcast %cst_5 : f32 to vector<16x128xf32>
    %7 = arith.maximumf %5, %6 : vector<16x128xf32>
    %8 = arith.truncf %7 : vector<16x128xf32> to vector<16x128xbf16>
    %c0_6 = arith.constant 0 : index
    %c0_7 = arith.constant 0 : index
    %9 = vector.load %arg4[%c0_6, %c0_7] : memref<128x128xbf16, #tpu.memory_space<vmem>>, vector<128x128xbf16>
    %cst_8 = arith.constant dense<0.000000e+00> : vector<16x128xf32>
    %10 = tpu.matmul %8, %9, %cst_8 {dimension_numbers = #tpu.dot_dimension_numbers<[1], [0], [0], [1], [0, 0, 1, 1], [], []>} : vector<16x128xbf16>, vector<128x128xbf16>, vector<16x128xf32> -> vector<16x128xf32>
    %c0_9 = arith.constant 0 : index
    %c0_10 = arith.constant 0 : index
    %11 = vector.load %arg5[%c0_9, %c0_10] : memref<1x128xf32, #tpu.memory_space<vmem>>, vector<1x128xf32>
    %12 = vector.broadcast %11 : vector<1x128xf32> to vector<16x128xf32>
    %13 = arith.addf %10, %12 : vector<16x128xf32>
    %cst_11 = arith.constant 0.000000e+00 : f32
    %14 = vector.broadcast %cst_11 : f32 to vector<16x128xf32>
    %15 = arith.maximumf %13, %14 : vector<16x128xf32>
    %16 = arith.truncf %15 : vector<16x128xf32> to vector<16x128xbf16>
    %c0_12 = arith.constant 0 : index
    %c0_13 = arith.constant 0 : index
    %17 = vector.load %arg6[%c0_12, %c0_13] : memref<128x128xbf16, #tpu.memory_space<vmem>>, vector<128x128xbf16>
    %cst_14 = arith.constant dense<0.000000e+00> : vector<16x128xf32>
    %18 = tpu.matmul %16, %17, %cst_14 {dimension_numbers = #tpu.dot_dimension_numbers<[1], [0], [0], [1], [0, 0, 1, 1], [], []>} : vector<16x128xbf16>, vector<128x128xbf16>, vector<16x128xf32> -> vector<16x128xf32>
    %c0_15 = arith.constant 0 : index
    %c0_16 = arith.constant 0 : index
    %19 = vector.load %arg7[%c0_15, %c0_16] : memref<1x128xf32, #tpu.memory_space<vmem>>, vector<1x128xf32>
    %20 = vector.broadcast %19 : vector<1x128xf32> to vector<16x128xf32>
    %21 = arith.addf %18, %20 : vector<16x128xf32>
    %22 = tpu.iota {dimensions = array<i32: 1>} : vector<16x128xi32>
    %c10_i32 = arith.constant 10 : i32
    %23 = vector.broadcast %c10_i32 : i32 to vector<16x128xi32>
    %24 = arith.cmpi slt, %22, %23 : vector<16x128xi32>
    %cst_17 = arith.constant -1.000000e+30 : f32
    %25 = vector.broadcast %cst_17 : f32 to vector<16x128xf32>
    %26 = arith.select %24, %21, %25 : vector<16x128xi1>, vector<16x128xf32>
    %cst_18 = arith.constant dense<0xFF800000> : vector<16xf32>
    %27 = vector.multi_reduction <maximumf>, %26, %cst_18 [1] : vector<16x128xf32> to vector<16xf32>
    %28 = vector.shape_cast %27 : vector<16xf32> to vector<16x1xf32>
    %29 = vector.broadcast %28 : vector<16x1xf32> to vector<16x128xf32>
    %30 = arith.subf %26, %29 : vector<16x128xf32>
    %31 = math.exp %30 : vector<16x128xf32>
    %cst_19 = arith.constant dense<0.000000e+00> : vector<16xf32>
    %32 = vector.multi_reduction <add>, %31, %cst_19 [1] : vector<16x128xf32> to vector<16xf32>
    %33 = vector.shape_cast %32 : vector<16xf32> to vector<16x1xf32>
    %34 = vector.broadcast %33 : vector<16x1xf32> to vector<16x128xf32>
    %35 = arith.divf %31, %34 : vector<16x128xf32>
    %c0_20 = arith.constant 0 : index
    %c0_21 = arith.constant 0 : index
    %36 = vector.load %arg8[%c0_20, %c0_21] : memref<16x128xf32, #tpu.memory_space<vmem>>, vector<16x128xf32>
    tpu.vector_store %arg8[%c0_20, %c0_21], %35 {strides = array<i32>} : memref<16x128xf32, #tpu.memory_space<vmem>>, vector<16x128xf32>,
    return
  }
  func.func @transform_0(%arg0: i32) -> (i32, i32) {
    %c0_i32 = arith.constant 0 : i32
    %c0_i32_0 = arith.constant 0 : i32
    return %arg0, %c0_i32 : i32, i32
  }
  func.func @transform_1(%arg0: i32) -> (i32, i32) {
    %c0_i32 = arith.constant 0 : i32
    %c0_i32_0 = arith.constant 0 : i32
    %c0_i32_1 = arith.constant 0 : i32
    return %c0_i32, %c0_i32_0 : i32, i32
  }
  func.func @transform_2(%arg0: i32) -> (i32, i32) {
    %c0_i32 = arith.constant 0 : i32
    %c0_i32_0 = arith.constant 0 : i32
    %c0_i32_1 = arith.constant 0 : i32
    return %c0_i32, %c0_i32_0 : i32, i32
  }
  func.func @transform_3(%arg0: i32) -> (i32, i32) {
    %c0_i32 = arith.constant 0 : i32
    %c0_i32_0 = arith.constant 0 : i32
    %c0_i32_1 = arith.constant 0 : i32
    return %c0_i32, %c0_i32_0 : i32, i32
  }
  func.func @transform_4(%arg0: i32) -> (i32, i32) {
    %c0_i32 = arith.constant 0 : i32
    %c0_i32_0 = arith.constant 0 : i32
    %c0_i32_1 = arith.constant 0 : i32
    return %c0_i32, %c0_i32_0 : i32, i32
  }
  func.func @transform_5(%arg0: i32) -> (i32, i32) {
    %c0_i32 = arith.constant 0 : i32
    %c0_i32_0 = arith.constant 0 : i32
    %c0_i32_1 = arith.constant 0 : i32
    return %c0_i32, %c0_i32_0 : i32, i32
  }
  func.func @transform_6(%arg0: i32) -> (i32, i32) {
    %c0_i32 = arith.constant 0 : i32
    %c0_i32_0 = arith.constant 0 : i32
    %c0_i32_1 = arith.constant 0 : i32
    return %c0_i32, %c0_i32_0 : i32, i32
  }
  func.func @transform_7(%arg0: i32) -> (i32, i32) {
    %c0_i32 = arith.constant 0 : i32
    %c0_i32_0 = arith.constant 0 : i32
    return %arg0, %c0_i32 : i32, i32
  }
}

</mosaic_0001>

<llo_original>
// kernel: lenet_forward.3
$region0: #{lenet_forward.3}
  #allocation0 [shape = 'u32[]', space=smem, size = 0x4, offset = 0x4, fixed_abs, tag = 'smem constant byte address 0x4 - core index']
  #allocation1 [shape = 'u32[144,128]{1,0:T(1,128)}', space=vmem, size = 0x12000, scoped, tag = 'internal scratch']
  %s0 = inlined_call_operand.vmem [shape: bf16[2,832,25], index: 0, kind: input, shape index: {}]
  %s1 = inlined_call_operand.vmem [shape: bf16[25,128], index: 1, kind: input, shape index: {}]
  %s2 = inlined_call_operand.vmem [shape: f32[1,128], index: 2, kind: input, shape index: {}]
  %s3 = inlined_call_operand.vmem [shape: bf16[2,208,128], index: 3, kind: output, shape index: {}]
  %s4 = sld [smem:[#allocation0]]
  $region45: #{lenet_forward.3} parent=0
    _
  %s6 = ssub.s32 1, %s4
  %s7 = scalar_select 0, %s6, %s4
  loop: start=0, step=1, limit=4
  $region2: #{lenet_forward.3} parent=0 // loop_pre_header
    _
  $region3: #{lenet_forward.3} parent=0 // loop_header
    %s9 = sphi 0, %s13
    %p10 = scmp.ge.s32.totalorder %s9, 4
    %s19 = sphi 0, %s21
    %s22 = sphi 0, %s19
    %s23 = sphi 0, %s22
    %s39 = sphi 0, %s23
    %s43 = sphi 0, %s43
    %s45 = sphi 0, %s43
    %s46 = sphi 0, %s45
    %s60 = sphi 0, %s46
    %s64 = sphi 0, %s64
    %s66 = sphi 0, %s64
    %s67 = sphi 0, %s66
    %s81 = sphi 0, %s67
    %s87 = sphi 0, %s89
    %s90 = sphi 0, %s87
    %s91 = sphi 0, %s90
    %s107 = sphi 0, %s91
  $region4: #{lenet_forward.3} parent=0 // loop_header_branch
    %12 = sbr.rel (%p10) target = $region8
  $region5: #{lenet_forward.3} parent=0 // loop_body
    %s14 = ssub.s32 %s9, 1
    %s15 = ssub.s32 %s9, 2
    %s16 = sadd.s32 %s9, 1
    %s17 = ssub.s32 %s9, %s16
    %p18 = scmp.eq.s32.totalorder %s17, 0
    %s20 = sadd.s32 %s19, 1
    %s21 = scalar_select %p18, %s19, %s20
    %p24 = pneg %p18
    %p25 = scmp.eq.s32.totalorder %s9, 1
    %p26 = por %p24, %p25
    %p27 = scmp.ne.s32.totalorder %s19, %s22
    %p28 = scmp.eq.s32.totalorder %s9, 0
    %p29 = por %p27, %p28
    %p30 = scmp.ne.s32.totalorder %s19, %s22
    %p31 = scmp.eq.s32.totalorder %s14, 1
    %p32 = por %p30, %p31
    %p33 = scmp.ne.s32.totalorder %s22, %s23
    %p34 = scmp.eq.s32.totalorder %s14, 0
    %p35 = por %p33, %p34
    %p36 = scmp.ne.s32.totalorder %s22, %s23
    %p37 = scmp.eq.s32.totalorder %s15, 1
    %p38 = por %p36, %p37
    %p40 = scmp.ne.s32.totalorder %s23, %s39
    %p41 = scmp.eq.s32.totalorder %s15, 0
    %p42 = por %p40, %p41
    %s44 = sadd.s32 %s43, 1
    %p47 = scmp.eq.s32.totalorder %s9, 1
    %p48 = scmp.ne.s32.totalorder %s43, %s45
    %p49 = scmp.eq.s32.totalorder %s9, 0
    %p50 = por %p48, %p49
    %p51 = scmp.ne.s32.totalorder %s43, %s45
    %p52 = scmp.eq.s32.totalorder %s14, 1
    %p53 = por %p51, %p52
    %p54 = scmp.ne.s32.totalorder %s45, %s46
    %p55 = scmp.eq.s32.totalorder %s14, 0
    %p56 = por %p54, %p55
    %p57 = scmp.ne.s32.totalorder %s45, %s46
    %p58 = scmp.eq.s32.totalorder %s15, 1
    %p59 = por %p57, %p58
    %p61 = scmp.ne.s32.totalorder %s46, %s60
    %p62 = scmp.eq.s32.totalorder %s15, 0
    %p63 = por %p61, %p62
    %s65 = sadd.s32 %s64, 1
    %p68 = scmp.eq.s32.totalorder %s9, 1
    %p69 = scmp.ne.s32.totalorder %s64, %s66
    %p70 = scmp.eq.s32.totalorder %s9, 0
    %p71 = por %p69, %p70
    %p72 = scmp.ne.s32.totalorder %s64, %s66
    %p73 = scmp.eq.s32.totalorder %s14, 1
    %p74 = por %p72, %p73
    %p75 = scmp.ne.s32.totalorder %s66, %s67
    %p76 = scmp.eq.s32.totalorder %s14, 0
    %p77 = por %p75, %p76
    %p78 = scmp.ne.s32.totalorder %s66, %s67
    %p79 = scmp.eq.s32.totalorder %s15, 1
    %p80 = por %p78, %p79
    %p82 = scmp.ne.s32.totalorder %s67, %s81
    %p83 = scmp.eq.s32.totalorder %s15, 0
    %p84 = por %p82, %p83
    %s85 = ssub.s32 %s9, %s16
    %p86 = scmp.eq.s32.totalorder %s85, 0
    %s88 = sadd.s32 %s87, 1
    %s89 = scalar_select %p86, %s87, %s88
    %p92 = pneg %p86
    %p93 = scmp.eq.s32.totalorder %s9, 1
    %p94 = por %p92, %p93
    %p95 = scmp.ne.s32.totalorder %s87, %s90
    %p96 = scmp.eq.s32.totalorder %s9, 0
    %p97 = por %p95, %p96
    %p98 = scmp.ne.s32.totalorder %s87, %s90
    %p99 = scmp.eq.s32.totalorder %s14, 1
    %p100 = por %p98, %p99
    %p101 = scmp.ne.s32.totalorder %s90, %s91
    %p102 = scmp.eq.s32.totalorder %s14, 0
    %p103 = por %p101, %p102
    %p104 = scmp.ne.s32.totalorder %s90, %s91
    %p105 = scmp.eq.s32.totalorder %s15, 1
    %p106 = por %p104, %p105
    %p108 = scmp.ne.s32.totalorder %s91, %s107
    %p109 = scmp.eq.s32.totalorder %s15, 0
    %p110 = por %p108, %p109
    %p111 = scmp.le.s32.totalorder 1, %s9
    %p112 = scmp.lt.s32.totalorder %s9, 3
    %p113 = pnand %p111, %p112
    %p114 = pneg %p113
    // Predicated region
    $region9: #{lenet_forward.3} parent=5 // pred_check
      _
    $region10: #{lenet_forward.3} parent=5 // pred_check_branch
      %116 = sbr.rel (%p113) target = $region12
    $region11: #{lenet_forward.3} parent=5 // pred_region
      %s117 = ssub.s32 %s9, 1
      // Predicated region
      $region13: #{lenet_forward.3} parent=11 // pred_check
        %p118 = pneg %p56
      $region14: #{lenet_forward.3} parent=11 // pred_check_branch
        %120 = sbr.rel (%p118) target = $region16
      $region15: #{lenet_forward.3} parent=11 // pred_region
        _
      $region16: #{lenet_forward.3} parent=11 // pred_fallthru
        _
      // Predicated region
      $region17: #{lenet_forward.3} parent=11 // pred_check
        %p121 = pneg %p77
      $region18: #{lenet_forward.3} parent=11 // pred_check_branch
        %123 = sbr.rel (%p121) target = $region20
      $region19: #{lenet_forward.3} parent=11 // pred_region
        _
      $region20: #{lenet_forward.3} parent=11 // pred_fallthru
        _
    $region12: #{lenet_forward.3} parent=5 // pred_fallthru
      _
    %p124 = scmp.lt.s32.totalorder %s9, 2
    // Predicated region
    $region21: #{lenet_forward.3} parent=5 // pred_check
      %p125 = pneg %p124
    $region22: #{lenet_forward.3} parent=5 // pred_check_branch
      %127 = sbr.rel (%p125) target = $region24
    $region23: #{lenet_forward.3} parent=5 // pred_region
      // Predicated region
      $region25: #{lenet_forward.3} parent=23 // pred_check
        %p128 = pneg %p29
      $region26: #{lenet_forward.3} parent=23 // pred_check_branch
        %130 = sbr.rel (%p128) target = $region28
      $region27: #{lenet_forward.3} parent=23 // pred_region
        %p131 = scmp.lt.s32.totalorder %s9, 1
        %s132 = scalar_select %p131, %s9, 1
        %s133 = smul.addr %s132, 104
        %s134 = smul.addr %s133, 4
        %s135 = scalar_lea.vmem %s0, %s134
      $region28: #{lenet_forward.3} parent=23 // pred_fallthru
        _
    $region24: #{lenet_forward.3} parent=5 // pred_fallthru
      _
    %p136 = scmp.le.s32.totalorder 1, %s9
    %p137 = scmp.lt.s32.totalorder %s9, 3
    %p138 = pnand %p136, %p137
    %p139 = pneg %p138
    // Predicated region
    $region29: #{lenet_forward.3} parent=5 // pred_check
      _
    $region30: #{lenet_forward.3} parent=5 // pred_check_branch
      %141 = sbr.rel (%p138) target = $region32
    $region31: #{lenet_forward.3} parent=5 // pred_region
      %s142 = ssub.s32 %s9, 1
      %p143 = scmp.lt.s32.totalorder %s14, 1
      %s144 = scalar_select %p143, %s14, 1
      %s145 = smul.addr %s144, 104
      %s146 = smul.addr %s145, 4
      %s147 = scalar_lea.vmem %s0, %s146
      %p148 = pneg %p35
      %p149 = pneg %p32
      %p150 = pneg %p56
      %p151 = pneg %p53
      %p152 = pneg %p77
      %p153 = pneg %p74
      %p154 = pneg %p103
      %p155 = pneg %p100
      %p156 = scmp.lt.s32.totalorder %s14, 1
      %s157 = scalar_select %p156, %s14, 1
      %s158 = smul.addr %s157, 26
      %s159 = smul.addr %s158, 4
      %s160 = scalar_lea.vmem %s3, %s159
      %p161 = scmp.lt.s32.totalorder %s14, 1
      %s162 = scalar_select %p161, %s14, 1
      %s163 = smul.addr %s162, 104
      %s164 = smul.addr %s163, 4
      %s165 = scalar_lea.vmem %s0, %s164
      %p166 = scmp.lt.s32.totalorder %s14, 1
      %s167 = scalar_select %p166, %s14, 1
      %s168 = smul.addr %s167, 26
      %s169 = smul.addr %s168, 4
      %s170 = scalar_lea.vmem %s3, %s169
      %v172 = vld [vmem:[%s165] sm:$0xf]
      %v173 = vld [vmem:[%s165 + $0x4] sm:$0xf]
      %v174 = vld [vmem:[%s165 + $0x8] sm:$0xf]
      %v175 = vld [vmem:[%s165 + $0xc] sm:$0xf]
      %v176 = vld [vmem:[%s165 + $0x10] sm:$0xf]
      %v177 = vld [vmem:[%s165 + $0x14] sm:$0xf]
      %v178 = vld [vmem:[%s165 + $0x18] sm:$0xf]
      %v179 = vld [vmem:[%s165 + $0x1c] sm:$0xf]
      %v180 = vld [vmem:[%s165 + $0x20] sm:$0xf]
      %v181 = vld [vmem:[%s165 + $0x24] sm:$0xf]
      %v182 = vld [vmem:[%s165 + $0x28] sm:$0xf]
      %v183 = vld [vmem:[%s165 + $0x2c] sm:$0xf]
      %v184 = vld [vmem:[%s165 + $0x30] sm:$0xf]
      %v185 = vld [vmem:[%s165 + $0x34] sm:$0xf]
      %v186 = vld [vmem:[%s165 + $0x38] sm:$0xf]
      %v187 = vld [vmem:[%s165 + $0x3c] sm:$0xf]
      %v188 = vld [vmem:[%s165 + $0x40] sm:$0xf]
      %v189 = vld [vmem:[%s165 + $0x44] sm:$0xf]
      %v190 = vld [vmem:[%s165 + $0x48] sm:$0xf]
      %v191 = vld [vmem:[%s165 + $0x4c] sm:$0xf]
      %v192 = vld [vmem:[%s165 + $0x50] sm:$0xf]
      %v193 = vld [vmem:[%s165 + $0x54] sm:$0xf]
      %v194 = vld [vmem:[%s165 + $0x58] sm:$0xf]
      %v195 = vld [vmem:[%s165 + $0x5c] sm:$0xf]
      %v196 = vld [vmem:[%s165 + $0x60] sm:$0xf]
      %v197 = vld [vmem:[%s165 + $0x64] sm:$0xf]
      %v198 = vld [vmem:[%s165 + $0x68] sm:$0xf]
      %v199 = vld [vmem:[%s165 + $0x6c] sm:$0xf]
      %v200 = vld [vmem:[%s165 + $0x70] sm:$0xf]
      %v201 = vld [vmem:[%s165 + $0x74] sm:$0xf]
      %v202 = vld [vmem:[%s165 + $0x78] sm:$0xf]
      %v203 = vld [vmem:[%s165 + $0x7c] sm:$0xf]
      %v204 = vld [vmem:[%s165 + $0x80] sm:$0xf]
      %v205 = vld [vmem:[%s165 + $0x84] sm:$0xf]
      %v206 = vld [vmem:[%s165 + $0x88] sm:$0xf]
      %v207 = vld [vmem:[%s165 + $0x8c] sm:$0xf]
      %v208 = vld [vmem:[%s165 + $0x90] sm:$0xf]
      %v209 = vld [vmem:[%s165 + $0x94] sm:$0xf]
      %v210 = vld [vmem:[%s165 + $0x98] sm:$0xf]
      %v211 = vld [vmem:[%s165 + $0x9c] sm:$0xf]
      %v212 = vld [vmem:[%s165 + $0xa0] sm:$0xf]
      %v213 = vld [vmem:[%s165 + $0xa4] sm:$0xf]
      %v214 = vld [vmem:[%s165 + $0xa8] sm:$0xf]
      %v215 = vld [vmem:[%s165 + $0xac] sm:$0xf]
      %v216 = vld [vmem:[%s165 + $0xb0] sm:$0xf]
      %v217 = vld [vmem:[%s165 + $0xb4] sm:$0xf]
      %v218 = vld [vmem:[%s165 + $0xb8] sm:$0xf]
      %v219 = vld [vmem:[%s165 + $0xbc] sm:$0xf]
      %v220 = vld [vmem:[%s165 + $0xc0] sm:$0xf]
      %v221 = vld [vmem:[%s165 + $0xc4] sm:$0xf]
      %v222 = vld [vmem:[%s165 + $0xc8] sm:$0xf]
      %v223 = vld [vmem:[%s165 + $0xcc] sm:$0xf]
      %v224 = vld [vmem:[%s165 + $0xd0] sm:$0xf]
      %v225 = vld [vmem:[%s165 + $0xd4] sm:$0xf]
      %v226 = vld [vmem:[%s165 + $0xd8] sm:$0xf]
      %v227 = vld [vmem:[%s165 + $0xdc] sm:$0xf]
      %v228 = vld [vmem:[%s165 + $0xe0] sm:$0xf]
      %v229 = vld [vmem:[%s165 + $0xe4] sm:$0xf]
      %v230 = vld [vmem:[%s165 + $0xe8] sm:$0xf]
      %v231 = vld [vmem:[%s165 + $0xec] sm:$0xf]
      %v232 = vld [vmem:[%s165 + $0xf0] sm:$0xf]
      %v233 = vld [vmem:[%s165 + $0xf4] sm:$0xf]
      %v234 = vld [vmem:[%s165 + $0xf8] sm:$0xf]
      %v235 = vld [vmem:[%s165 + $0xfc] sm:$0xf]
      %v236 = vld [vmem:[%s165 + $0x100] sm:$0xf]
      %v237 = vld [vmem:[%s165 + $0x104] sm:$0xf]
      %v238 = vld [vmem:[%s165 + $0x108] sm:$0xf]
      %v239 = vld [vmem:[%s165 + $0x10c] sm:$0xf]
      %v240 = vld [vmem:[%s165 + $0x110] sm:$0xf]
      %v241 = vld [vmem:[%s165 + $0x114] sm:$0xf]
      %v242 = vld [vmem:[%s165 + $0x118] sm:$0xf]
      %v243 = vld [vmem:[%s165 + $0x11c] sm:$0xf]
      %v244 = vld [vmem:[%s165 + $0x120] sm:$0xf]
      %v245 = vld [vmem:[%s165 + $0x124] sm:$0xf]
      %v246 = vld [vmem:[%s165 + $0x128] sm:$0xf]
      %v247 = vld [vmem:[%s165 + $0x12c] sm:$0xf]
      %v248 = vld [vmem:[%s165 + $0x130] sm:$0xf]
      %v249 = vld [vmem:[%s165 + $0x134] sm:$0xf]
      %v250 = vld [vmem:[%s165 + $0x138] sm:$0xf]
      %v251 = vld [vmem:[%s165 + $0x13c] sm:$0xf]
      %v252 = vld [vmem:[%s165 + $0x140] sm:$0xf]
      %v253 = vld [vmem:[%s165 + $0x144] sm:$0xf]
      %v254 = vld [vmem:[%s165 + $0x148] sm:$0xf]
      %v255 = vld [vmem:[%s165 + $0x14c] sm:$0xf]
      %v256 = vld [vmem:[%s165 + $0x150] sm:$0xf]
      %v257 = vld [vmem:[%s165 + $0x154] sm:$0xf]
      %v258 = vld [vmem:[%s165 + $0x158] sm:$0xf]
      %v259 = vld [vmem:[%s165 + $0x15c] sm:$0xf]
      %v260 = vld [vmem:[%s165 + $0x160] sm:$0xf]
      %v261 = vld [vmem:[%s165 + $0x164] sm:$0xf]
      %v262 = vld [vmem:[%s165 + $0x168] sm:$0xf]
      %v263 = vld [vmem:[%s165 + $0x16c] sm:$0xf]
      %v264 = vld [vmem:[%s165 + $0x170] sm:$0xf]
      %v265 = vld [vmem:[%s165 + $0x174] sm:$0xf]
      %v266 = vld [vmem:[%s165 + $0x178] sm:$0xf]
      %v267 = vld [vmem:[%s165 + $0x17c] sm:$0xf]
      %v268 = vld [vmem:[%s165 + $0x180] sm:$0xf]
      %v269 = vld [vmem:[%s165 + $0x184] sm:$0xf]
      %v270 = vld [vmem:[%s165 + $0x188] sm:$0xf]
      %v271 = vld [vmem:[%s165 + $0x18c] sm:$0xf]
      %v272 = vld [vmem:[%s165 + $0x190] sm:$0xf]
      %v273 = vld [vmem:[%s165 + $0x194] sm:$0xf]
      %v274 = vld [vmem:[%s165 + $0x198] sm:$0xf]
      %v275 = vld [vmem:[%s165 + $0x19c] sm:$0xf]
      %v276 = vld [vmem:[%s1] sm:$0xf]
      %v277 = vld [vmem:[%s1 + $0x4] sm:$0xf]
      %v278 = vld [vmem:[%s1 + $0x8] sm:$0xf]
      %v279 = vld [vmem:[%s1 + $0xc] sm:$0x1]
      %v384 = vunpack.c.l.b16 %v172
      %v385 = vunpack.c.l.b16 %v173
      %v386 = vunpack.c.l.b16 %v174
      %v387 = vunpack.c.l.b16 %v175
      %v388 = vunpack.c.l.b16 %v176
      %v389 = vunpack.c.l.b16 %v177
      %v390 = vunpack.c.l.b16 %v178
      %v391 = vunpack.c.l.b16 %v179
      %v392 = vunpack.c.l.b16 %v180
      %v393 = vunpack.c.l.b16 %v181
      %v394 = vunpack.c.l.b16 %v182
      %v395 = vunpack.c.l.b16 %v183
      %v396 = vunpack.c.l.b16 %v184
      %v397 = vunpack.c.l.b16 %v185
      %v398 = vunpack.c.l.b16 %v186
      %v399 = vunpack.c.l.b16 %v187
      %v400 = vunpack.c.l.b16 %v188
      %v401 = vunpack.c.l.b16 %v189
      %v402 = vunpack.c.l.b16 %v190
      %v403 = vunpack.c.l.b16 %v191
      %v404 = vunpack.c.l.b16 %v192
      %v405 = vunpack.c.l.b16 %v193
      %v406 = vunpack.c.l.b16 %v194
      %v407 = vunpack.c.l.b16 %v195
      %v408 = vunpack.c.l.b16 %v196
      %v409 = vunpack.c.l.b16 %v197
      %v410 = vunpack.c.l.b16 %v198
      %v411 = vunpack.c.l.b16 %v199
      %v412 = vunpack.c.l.b16 %v200
      %v413 = vunpack.c.l.b16 %v201
      %v414 = vunpack.c.l.b16 %v202
      %v415 = vunpack.c.l.b16 %v203
      %v416 = vunpack.c.l.b16 %v204
      %v417 = vunpack.c.l.b16 %v205
      %v418 = vunpack.c.l.b16 %v206
      %v419 = vunpack.c.l.b16 %v207
      %v420 = vunpack.c.l.b16 %v208
      %v421 = vunpack.c.l.b16 %v209
      %v422 = vunpack.c.l.b16 %v210
      %v423 = vunpack.c.l.b16 %v211
      %v424 = vunpack.c.l.b16 %v212
      %v425 = vunpack.c.l.b16 %v213
      %v426 = vunpack.c.l.b16 %v214
      %v427 = vunpack.c.l.b16 %v215
      %v428 = vunpack.c.l.b16 %v216
      %v429 = vunpack.c.l.b16 %v217
      %v430 = vunpack.c.l.b16 %v218
      %v431 = vunpack.c.l.b16 %v219
      %v432 = vunpack.c.l.b16 %v220
      %v433 = vunpack.c.l.b16 %v221
      %v434 = vunpack.c.l.b16 %v222
      %v435 = vunpack.c.l.b16 %v223
      %v436 = vunpack.c.l.b16 %v224
      %v437 = vunpack.c.l.b16 %v225
      %v438 = vunpack.c.l.b16 %v226
      %v439 = vunpack.c.l.b16 %v227
      %v440 = vunpack.c.l.b16 %v228
      %v441 = vunpack.c.l.b16 %v229
      %v442 = vunpack.c.l.b16 %v230
      %v443 = vunpack.c.l.b16 %v231
      %v444 = vunpack.c.l.b16 %v232
      %v445 = vunpack.c.l.b16 %v233
      %v446 = vunpack.c.l.b16 %v234
      %v447 = vunpack.c.l.b16 %v235
      %v448 = vunpack.c.l.b16 %v236
      %v449 = vunpack.c.l.b16 %v237
      %v450 = vunpack.c.l.b16 %v238
      %v451 = vunpack.c.l.b16 %v239
      %v452 = vunpack.c.l.b16 %v240
      %v453 = vunpack.c.l.b16 %v241
      %v454 = vunpack.c.l.b16 %v242
      %v455 = vunpack.c.l.b16 %v243
      %v456 = vunpack.c.l.b16 %v244
      %v457 = vunpack.c.l.b16 %v245
      %v458 = vunpack.c.l.b16 %v246
      %v459 = vunpack.c.l.b16 %v247
      %v460 = vunpack.c.l.b16 %v248
      %v461 = vunpack.c.l.b16 %v249
      %v462 = vunpack.c.l.b16 %v250
      %v463 = vunpack.c.l.b16 %v251
      %v464 = vunpack.c.l.b16 %v252
      %v465 = vunpack.c.l.b16 %v253
      %v466 = vunpack.c.l.b16 %v254
      %v467 = vunpack.c.l.b16 %v255
      %v468 = vunpack.c.l.b16 %v256
      %v469 = vunpack.c.l.b16 %v257
      %v470 = vunpack.c.l.b16 %v258
      %v471 = vunpack.c.l.b16 %v259
      %v472 = vunpack.c.l.b16 %v260
      %v473 = vunpack.c.l.b16 %v261
      %v474 = vunpack.c.l.b16 %v262
      %v475 = vunpack.c.l.b16 %v263
      %v476 = vunpack.c.l.b16 %v264
      %v477 = vunpack.c.l.b16 %v265
      %v478 = vunpack.c.l.b16 %v266
      %v479 = vunpack.c.l.b16 %v267
      %v480 = vunpack.c.l.b16 %v268
      %v481 = vunpack.c.l.b16 %v269
      %v482 = vunpack.c.l.b16 %v270
      %v483 = vunpack.c.l.b16 %v271
      %v484 = vunpack.c.l.b16 %v272
      %v485 = vunpack.c.l.b16 %v273
      %v486 = vunpack.c.l.b16 %v274
      %v487 = vunpack.c.l.b16 %v275
      %v488 = vpack.c.b16 %v385, %v384
      %v489 = vpack.c.b16 %v387, %v386
      %v490 = vpack.c.b16 %v389, %v388
      %v491 = vpack.c.b16 %v391, %v390
      %v492 = vpack.c.b16 %v393, %v392
      %v493 = vpack.c.b16 %v395, %v394
      %v494 = vpack.c.b16 %v397, %v396
      %v495 = vpack.c.b16 %v399, %v398
      %v496 = vpack.c.b16 %v401, %v400
      %v497 = vpack.c.b16 %v403, %v402
      %v498 = vpack.c.b16 %v405, %v404
      %v499 = vpack.c.b16 %v407, %v406
      %v500 = vpack.c.b16 %v409, %v408
      %v501 = vpack.c.b16 %v411, %v410
      %v502 = vpack.c.b16 %v413, %v412
      %v503 = vpack.c.b16 %v415, %v414
      %v504 = vpack.c.b16 %v417, %v416
      %v505 = vpack.c.b16 %v419, %v418
      %v506 = vpack.c.b16 %v421, %v420
      %v507 = vpack.c.b16 %v423, %v422
      %v508 = vpack.c.b16 %v425, %v424
      %v509 = vpack.c.b16 %v427, %v426
      %v510 = vpack.c.b16 %v429, %v428
      %v511 = vpack.c.b16 %v431, %v430
      %v512 = vpack.c.b16 %v433, %v432
      %v513 = vpack.c.b16 %v435, %v434
      %v514 = vpack.c.b16 %v437, %v436
      %v515 = vpack.c.b16 %v439, %v438
      %v516 = vpack.c.b16 %v441, %v440
      %v517 = vpack.c.b16 %v443, %v442
      %v518 = vpack.c.b16 %v445, %v444
      %v519 = vpack.c.b16 %v447, %v446
      %v520 = vpack.c.b16 %v449, %v448
      %v521 = vpack.c.b16 %v451, %v450
      %v522 = vpack.c.b16 %v453, %v452
      %v523 = vpack.c.b16 %v455, %v454
      %v524 = vpack.c.b16 %v457, %v456
      %v525 = vpack.c.b16 %v459, %v458
      %v526 = vpack.c.b16 %v461, %v460
      %v527 = vpack.c.b16 %v463, %v462
      %v528 = vpack.c.b16 %v465, %v464
      %v529 = vpack.c.b16 %v467, %v466
      %v530 = vpack.c.b16 %v469, %v468
      %v531 = vpack.c.b16 %v471, %v470
      %v532 = vpack.c.b16 %v473, %v472
      %v533 = vpack.c.b16 %v475, %v474
      %v534 = vpack.c.b16 %v477, %v476
      %v535 = vpack.c.b16 %v479, %v478
      %v536 = vpack.c.b16 %v481, %v480
      %v537 = vpack.c.b16 %v483, %v482
      %v538 = vpack.c.b16 %v485, %v484
      %v539 = vpack.c.b16 %v487, %v486
      %v544 = vunpack.c.l.b16 %v276
      %v545 = vunpack.c.l.b16 %v277
      %v546 = vunpack.c.l.b16 %v278
      %v547 = vunpack.c.l.b16 %v279
      %v548 = vpack.c.b16 %v545, %v544
      %v549 = vpack.c.b16 %v547, %v546
      %vm551 = vcmask 203776
      %v553 = vsel %vm551, %v488, 0
      %v556 = vsel %vm551, %v489, 0
      %v559 = vsel %vm551, %v490, 0
      %v562 = vsel %vm551, %v491, 0
      %v565 = vsel %vm551, %v492, 0
      %v568 = vsel %vm551, %v493, 0
      %v571 = vsel %vm551, %v494, 0
      %v574 = vsel %vm551, %v495, 0
      %v577 = vsel %vm551, %v496, 0
      %v580 = vsel %vm551, %v497, 0
      %v583 = vsel %vm551, %v498, 0
      %v586 = vsel %vm551, %v499, 0
      %v589 = vsel %vm551, %v500, 0
      %v592 = vsel %vm551, %v501, 0
      %v595 = vsel %vm551, %v502, 0
      %v598 = vsel %vm551, %v503, 0
      %v601 = vsel %vm551, %v504, 0
      %v604 = vsel %vm551, %v505, 0
      %v607 = vsel %vm551, %v506, 0
      %v610 = vsel %vm551, %v507, 0
      %v613 = vsel %vm551, %v508, 0
      %v616 = vsel %vm551, %v509, 0
      %v619 = vsel %vm551, %v510, 0
      %v622 = vsel %vm551, %v511, 0
      %v625 = vsel %vm551, %v512, 0
      %v628 = vsel %vm551, %v513, 0
      %v631 = vsel %vm551, %v514, 0
      %v634 = vsel %vm551, %v515, 0
      %v637 = vsel %vm551, %v516, 0
      %v640 = vsel %vm551, %v517, 0
      %v643 = vsel %vm551, %v518, 0
      %v646 = vsel %vm551, %v519, 0
      %v649 = vsel %vm551, %v520, 0
      %v652 = vsel %vm551, %v521, 0
      %v655 = vsel %vm551, %v522, 0
      %v658 = vsel %vm551, %v523, 0
      %v661 = vsel %vm551, %v524, 0
      %v664 = vsel %vm551, %v525, 0
      %v667 = vsel %vm551, %v526, 0
      %v670 = vsel %vm551, %v527, 0
      %v673 = vsel %vm551, %v528, 0
      %v676 = vsel %vm551, %v529, 0
      %v679 = vsel %vm551, %v530, 0
      %v682 = vsel %vm551, %v531, 0
      %v685 = vsel %vm551, %v532, 0
      %v688 = vsel %vm551, %v533, 0
      %v691 = vsel %vm551, %v534, 0
      %v694 = vsel %vm551, %v535, 0
      %v697 = vsel %vm551, %v536, 0
      %v700 = vsel %vm551, %v537, 0
      %v703 = vsel %vm551, %v538, 0
      %v706 = vsel %vm551, %v539, 0
      %vm708 = vcmask 1043456
      %vm709 = vcmask 1044480
      %v710 = vsel %vm708, 4294967295, 65535
      %v711 = vsel %vm709, %v710, 0
      %v713 = vand.u32 %v549, %v711
      %715 = vmatprep.subr.bf16.mxu0 0
      %716 = vmatpush1.bf16.msra.mxu0 0
      %717 = vmatprep.subr.bf16.mxu0 0
      %718 = vmatpush1.bf16.msra.mxu0 0
      %719 = vmatprep.subr.bf16.mxu0 0
      %720 = vmatpush1.bf16.msra.mxu0 0
      %721 = vmatprep.subr.bf16.mxu0 0
      %722 = vmatpush1.bf16.msra.mxu0 0
      %723 = vmatprep.subr.bf16.mxu0 0
      %724 = vmatpush1.bf16.msra.mxu0 0
      %725 = vmatprep.subr.bf16.mxu0 0
      %726 = vmatpush1.bf16.msra.mxu0 0
      %727 = vmatprep.subr.bf16.mxu0 0
      %728 = vmatpush1.bf16.msra.mxu0 %v713
      %729 = vmatprep.subr.bf16.mxu0 0
      %730 = vmatpush1.bf16.msra.mxu0 %v548
      %731 = vmatprep.subr.bf16.mxu0 0
      %732 = vmatpush2.bf16.msra.mxu0 0
      %733 = vmatprep.subr.bf16.mxu0 0
      %734 = vmatpush2.bf16.msra.mxu0 0
      %735 = vmatprep.subr.bf16.mxu0 0
      %736 = vmatpush2.bf16.msra.mxu0 0
      %737 = vmatprep.subr.bf16.mxu0 0
      %738 = vmatpush2.bf16.msra.mxu0 0
      %739 = vmatprep.subr.bf16.mxu0 0
      %740 = vmatpush2.bf16.msra.mxu0 0
      %741 = vmatprep.subr.bf16.mxu0 0
      %742 = vmatpush2.bf16.msra.mxu0 0
      %743 = vmatprep.subr.bf16.mxu0 0
      %744 = vmatpush2.bf16.msra.mxu0 0
      %745 = vmatprep.subr.bf16.mxu0 0
      %746 = vmatpush2.bf16.msra.mxu0 0
      %747 = vmatprep.mubr.bf16.mxu0 0
      %748 = vmatmul.mubr.bf16.gmra.mxu0 %v553
      %v749 = vpop.f32.mrf.mxu0
      %v750 = vadd.f32 0.0, %v749
      %v751 = vpop.f32.mrf.mxu0
      %v752 = vpop.f32.mrf.mxu0
      %v753 = vadd.f32 0.0, %v752
      %v754 = vpop.f32.mrf.mxu0
      %755 = vmatprep.mubr.bf16.mxu0 0
      %756 = vmatmul.mubr.bf16.gmra.mxu0 %v556
      %v757 = vpop.f32.mrf.mxu0
      %v758 = vadd.f32 0.0, %v757
      %v759 = vpop.f32.mrf.mxu0
      %v760 = vpop.f32.mrf.mxu0
      %v761 = vadd.f32 0.0, %v760
      %v762 = vpop.f32.mrf.mxu0
      %763 = vmatprep.mubr.bf16.mxu0 0
      %764 = vmatmul.mubr.bf16.gmra.mxu0 %v559
      %v765 = vpop.f32.mrf.mxu0
      %v766 = vadd.f32 0.0, %v765
      %v767 = vpop.f32.mrf.mxu0
      %v768 = vpop.f32.mrf.mxu0
      %v769 = vadd.f32 0.0, %v768
      %v770 = vpop.f32.mrf.mxu0
      %771 = vmatprep.mubr.bf16.mxu0 0
      %772 = vmatmul.mubr.bf16.gmra.mxu0 %v562
      %v773 = vpop.f32.mrf.mxu0
      %v774 = vadd.f32 0.0, %v773
      %v775 = vpop.f32.mrf.mxu0
      %v776 = vpop.f32.mrf.mxu0
      %v777 = vadd.f32 0.0, %v776
      %v778 = vpop.f32.mrf.mxu0
      %779 = vmatprep.mubr.bf16.mxu0 0
      %780 = vmatmul.mubr.bf16.gmra.mxu0 %v565
      %v781 = vpop.f32.mrf.mxu0
      %v782 = vadd.f32 0.0, %v781
      %v783 = vpop.f32.mrf.mxu0
      %v784 = vpop.f32.mrf.mxu0
      %v785 = vadd.f32 0.0, %v784
      %v786 = vpop.f32.mrf.mxu0
      %787 = vmatprep.mubr.bf16.mxu0 0
      %788 = vmatmul.mubr.bf16.gmra.mxu0 %v568
      %v789 = vpop.f32.mrf.mxu0
      %v790 = vadd.f32 0.0, %v789
      %v791 = vpop.f32.mrf.mxu0
      %v792 = vpop.f32.mrf.mxu0
      %v793 = vadd.f32 0.0, %v792
      %v794 = vpop.f32.mrf.mxu0
      %795 = vmatprep.mubr.bf16.mxu0 0
      %796 = vmatmul.mubr.bf16.gmra.mxu0 %v571
      %v797 = vpop.f32.mrf.mxu0
      %v798 = vadd.f32 0.0, %v797
      %v799 = vpop.f32.mrf.mxu0
      %v800 = vpop.f32.mrf.mxu0
      %v801 = vadd.f32 0.0, %v800
      %v802 = vpop.f32.mrf.mxu0
      %803 = vmatprep.mubr.bf16.mxu0 0
      %804 = vmatmul.mubr.bf16.gmra.mxu0 %v574
      %v805 = vpop.f32.mrf.mxu0
      %v806 = vadd.f32 0.0, %v805
      %v807 = vpop.f32.mrf.mxu0
      %v808 = vpop.f32.mrf.mxu0
      %v809 = vadd.f32 0.0, %v808
      %v810 = vpop.f32.mrf.mxu0
      %811 = vmatprep.mubr.bf16.mxu0 0
      %812 = vmatmul.mubr.bf16.gmra.mxu0 %v577
      %v813 = vpop.f32.mrf.mxu0
      %v814 = vadd.f32 0.0, %v813
      %v815 = vpop.f32.mrf.mxu0
      %v816 = vpop.f32.mrf.mxu0
      %v817 = vadd.f32 0.0, %v816
      %v818 = vpop.f32.mrf.mxu0
      %819 = vmatprep.mubr.bf16.mxu0 0
      %820 = vmatmul.mubr.bf16.gmra.mxu0 %v580
      %v821 = vpop.f32.mrf.mxu0
      %v822 = vadd.f32 0.0, %v821
      %v823 = vpop.f32.mrf.mxu0
      %v824 = vpop.f32.mrf.mxu0
      %v825 = vadd.f32 0.0, %v824
      %v826 = vpop.f32.mrf.mxu0
      %827 = vmatprep.mubr.bf16.mxu0 0
      %828 = vmatmul.mubr.bf16.gmra.mxu0 %v583
      %v829 = vpop.f32.mrf.mxu0
      %v830 = vadd.f32 0.0, %v829
      %v831 = vpop.f32.mrf.mxu0
      %v832 = vpop.f32.mrf.mxu0
      %v833 = vadd.f32 0.0, %v832
      %v834 = vpop.f32.mrf.mxu0
      %835 = vmatprep.mubr.bf16.mxu0 0
      %836 = vmatmul.mubr.bf16.gmra.mxu0 %v586
      %v837 = vpop.f32.mrf.mxu0
      %v838 = vadd.f32 0.0, %v837
      %v839 = vpop.f32.mrf.mxu0
      %v840 = vpop.f32.mrf.mxu0
      %v841 = vadd.f32 0.0, %v840
      %v842 = vpop.f32.mrf.mxu0
      %843 = vmatprep.mubr.bf16.mxu0 0
      %844 = vmatmul.mubr.bf16.gmra.mxu0 %v589
      %v845 = vpop.f32.mrf.mxu0
      %v846 = vadd.f32 0.0, %v845
      %v847 = vpop.f32.mrf.mxu0
      %v848 = vpop.f32.mrf.mxu0
      %v849 = vadd.f32 0.0, %v848
      %v850 = vpop.f32.mrf.mxu0
      %851 = vmatprep.mubr.bf16.mxu0 0
      %852 = vmatmul.mubr.bf16.gmra.mxu0 %v592
      %v853 = vpop.f32.mrf.mxu0
      %v854 = vadd.f32 0.0, %v853
      %v855 = vpop.f32.mrf.mxu0
      %v856 = vpop.f32.mrf.mxu0
      %v857 = vadd.f32 0.0, %v856
      %v858 = vpop.f32.mrf.mxu0
      %859 = vmatprep.mubr.bf16.mxu0 0
      %860 = vmatmul.mubr.bf16.gmra.mxu0 %v595
      %v861 = vpop.f32.mrf.mxu0
      %v862 = vadd.f32 0.0, %v861
      %v863 = vpop.f32.mrf.mxu0
      %v864 = vpop.f32.mrf.mxu0
      %v865 = vadd.f32 0.0, %v864
      %v866 = vpop.f32.mrf.mxu0
      %867 = vmatprep.mubr.bf16.mxu0 0
      %868 = vmatmul.mubr.bf16.gmra.mxu0 %v598
      %v869 = vpop.f32.mrf.mxu0
      %v870 = vadd.f32 0.0, %v869
      %v871 = vpop.f32.mrf.mxu0
      %v872 = vpop.f32.mrf.mxu0
      %v873 = vadd.f32 0.0, %v872
      %v874 = vpop.f32.mrf.mxu0
      %875 = vmatprep.mubr.bf16.mxu0 0
      %876 = vmatmul.mubr.bf16.gmra.mxu0 %v601
      %v877 = vpop.f32.mrf.mxu0
      %v878 = vadd.f32 0.0, %v877
      %v879 = vpop.f32.mrf.mxu0
      %v880 = vpop.f32.mrf.mxu0
      %v881 = vadd.f32 0.0, %v880
      %v882 = vpop.f32.mrf.mxu0
      %883 = vmatprep.mubr.bf16.mxu0 0
      %884 = vmatmul.mubr.bf16.gmra.mxu0 %v604
      %v885 = vpop.f32.mrf.mxu0
      %v886 = vadd.f32 0.0, %v885
      %v887 = vpop.f32.mrf.mxu0
      %v888 = vpop.f32.mrf.mxu0
      %v889 = vadd.f32 0.0, %v888
      %v890 = vpop.f32.mrf.mxu0
      %891 = vmatprep.mubr.bf16.mxu0 0
      %892 = vmatmul.mubr.bf16.gmra.mxu0 %v607
      %v893 = vpop.f32.mrf.mxu0
      %v894 = vadd.f32 0.0, %v893
      %v895 = vpop.f32.mrf.mxu0
      %v896 = vpop.f32.mrf.mxu0
      %v897 = vadd.f32 0.0, %v896
      %v898 = vpop.f32.mrf.mxu0
      %899 = vmatprep.mubr.bf16.mxu0 0
      %900 = vmatmul.mubr.bf16.gmra.mxu0 %v610
      %v901 = vpop.f32.mrf.mxu0
      %v902 = vadd.f32 0.0, %v901
      %v903 = vpop.f32.mrf.mxu0
      %v904 = vpop.f32.mrf.mxu0
      %v905 = vadd.f32 0.0, %v904
      %v906 = vpop.f32.mrf.mxu0
      %907 = vmatprep.mubr.bf16.mxu0 0
      %908 = vmatmul.mubr.bf16.gmra.mxu0 %v613
      %v909 = vpop.f32.mrf.mxu0
      %v910 = vadd.f32 0.0, %v909
      %v911 = vpop.f32.mrf.mxu0
      %v912 = vpop.f32.mrf.mxu0
      %v913 = vadd.f32 0.0, %v912
      %v914 = vpop.f32.mrf.mxu0
      %915 = vmatprep.mubr.bf16.mxu0 0
      %916 = vmatmul.mubr.bf16.gmra.mxu0 %v616
      %v917 = vpop.f32.mrf.mxu0
      %v918 = vadd.f32 0.0, %v917
      %v919 = vpop.f32.mrf.mxu0
      %v920 = vpop.f32.mrf.mxu0
      %v921 = vadd.f32 0.0, %v920
      %v922 = vpop.f32.mrf.mxu0
      %923 = vmatprep.mubr.bf16.mxu0 0
      %924 = vmatmul.mubr.bf16.gmra.mxu0 %v619
      %v925 = vpop.f32.mrf.mxu0
      %v926 = vadd.f32 0.0, %v925
      %v927 = vpop.f32.mrf.mxu0
      %v928 = vpop.f32.mrf.mxu0
      %v929 = vadd.f32 0.0, %v928
      %v930 = vpop.f32.mrf.mxu0
      %931 = vmatprep.mubr.bf16.mxu0 0
      %932 = vmatmul.mubr.bf16.gmra.mxu0 %v622
      %v933 = vpop.f32.mrf.mxu0
      %v934 = vadd.f32 0.0, %v933
      %v935 = vpop.f32.mrf.mxu0
      %v936 = vpop.f32.mrf.mxu0
      %v937 = vadd.f32 0.0, %v936
      %v938 = vpop.f32.mrf.mxu0
      %939 = vmatprep.mubr.bf16.mxu0 0
      %940 = vmatmul.mubr.bf16.gmra.mxu0 %v625
      %v941 = vpop.f32.mrf.mxu0
      %v942 = vadd.f32 0.0, %v941
      %v943 = vpop.f32.mrf.mxu0
      %v944 = vpop.f32.mrf.mxu0
      %v945 = vadd.f32 0.0, %v944
      %v946 = vpop.f32.mrf.mxu0
      %947 = vmatprep.mubr.bf16.mxu0 0
      %948 = vmatmul.mubr.bf16.gmra.mxu0 %v628
      %v949 = vpop.f32.mrf.mxu0
      %v950 = vadd.f32 0.0, %v949
      %v951 = vpop.f32.mrf.mxu0
      %v952 = vpop.f32.mrf.mxu0
      %v953 = vadd.f32 0.0, %v952
      %v954 = vpop.f32.mrf.mxu0
      %955 = vmatprep.mubr.bf16.mxu0 0
      %956 = vmatmul.mubr.bf16.gmra.mxu0 %v631
      %v957 = vpop.f32.mrf.mxu0
      %v958 = vadd.f32 0.0, %v957
      %v959 = vpop.f32.mrf.mxu0
      %v960 = vpop.f32.mrf.mxu0
      %v961 = vadd.f32 0.0, %v960
      %v962 = vpop.f32.mrf.mxu0
      %963 = vmatprep.mubr.bf16.mxu0 0
      %964 = vmatmul.mubr.bf16.gmra.mxu0 %v634
      %v965 = vpop.f32.mrf.mxu0
      %v966 = vadd.f32 0.0, %v965
      %v967 = vpop.f32.mrf.mxu0
      %v968 = vpop.f32.mrf.mxu0
      %v969 = vadd.f32 0.0, %v968
      %v970 = vpop.f32.mrf.mxu0
      %971 = vmatprep.mubr.bf16.mxu0 0
      %972 = vmatmul.mubr.bf16.gmra.mxu0 %v637
      %v973 = vpop.f32.mrf.mxu0
      %v974 = vadd.f32 0.0, %v973
      %v975 = vpop.f32.mrf.mxu0
      %v976 = vpop.f32.mrf.mxu0
      %v977 = vadd.f32 0.0, %v976
      %v978 = vpop.f32.mrf.mxu0
      %979 = vmatprep.mubr.bf16.mxu0 0
      %980 = vmatmul.mubr.bf16.gmra.mxu0 %v640
      %v981 = vpop.f32.mrf.mxu0
      %v982 = vadd.f32 0.0, %v981
      %v983 = vpop.f32.mrf.mxu0
      %v984 = vpop.f32.mrf.mxu0
      %v985 = vadd.f32 0.0, %v984
      %v986 = vpop.f32.mrf.mxu0
      %987 = vmatprep.mubr.bf16.mxu0 0
      %988 = vmatmul.mubr.bf16.gmra.mxu0 %v643
      %v989 = vpop.f32.mrf.mxu0
      %v990 = vadd.f32 0.0, %v989
      %v991 = vpop.f32.mrf.mxu0
      %v992 = vpop.f32.mrf.mxu0
      %v993 = vadd.f32 0.0, %v992
      %v994 = vpop.f32.mrf.mxu0
      %995 = vmatprep.mubr.bf16.mxu0 0
      %996 = vmatmul.mubr.bf16.gmra.mxu0 %v646
      %v997 = vpop.f32.mrf.mxu0
      %v998 = vadd.f32 0.0, %v997
      %v999 = vpop.f32.mrf.mxu0
      %v1000 = vpop.f32.mrf.mxu0
      %v1001 = vadd.f32 0.0, %v1000
      %v1002 = vpop.f32.mrf.mxu0
      %1003 = vmatprep.mubr.bf16.mxu0 0
      %1004 = vmatmul.mubr.bf16.gmra.mxu0 %v649
      %v1005 = vpop.f32.mrf.mxu0
      %v1006 = vadd.f32 0.0, %v1005
      %v1007 = vpop.f32.mrf.mxu0
      %v1008 = vpop.f32.mrf.mxu0
      %v1009 = vadd.f32 0.0, %v1008
      %v1010 = vpop.f32.mrf.mxu0
      %1011 = vmatprep.mubr.bf16.mxu0 0
      %1012 = vmatmul.mubr.bf16.gmra.mxu0 %v652
      %v1013 = vpop.f32.mrf.mxu0
      %v1014 = vadd.f32 0.0, %v1013
      %v1015 = vpop.f32.mrf.mxu0
      %v1016 = vpop.f32.mrf.mxu0
      %v1017 = vadd.f32 0.0, %v1016
      %v1018 = vpop.f32.mrf.mxu0
      %1019 = vmatprep.mubr.bf16.mxu0 0
      %1020 = vmatmul.mubr.bf16.gmra.mxu0 %v655
      %v1021 = vpop.f32.mrf.mxu0
      %v1022 = vadd.f32 0.0, %v1021
      %v1023 = vpop.f32.mrf.mxu0
      %v1024 = vpop.f32.mrf.mxu0
      %v1025 = vadd.f32 0.0, %v1024
      %v1026 = vpop.f32.mrf.mxu0
      %1027 = vmatprep.mubr.bf16.mxu0 0
      %1028 = vmatmul.mubr.bf16.gmra.mxu0 %v658
      %v1029 = vpop.f32.mrf.mxu0
      %v1030 = vadd.f32 0.0, %v1029
      %v1031 = vpop.f32.mrf.mxu0
      %v1032 = vpop.f32.mrf.mxu0
      %v1033 = vadd.f32 0.0, %v1032
      %v1034 = vpop.f32.mrf.mxu0
      %1035 = vmatprep.mubr.bf16.mxu0 0
      %1036 = vmatmul.mubr.bf16.gmra.mxu0 %v661
      %v1037 = vpop.f32.mrf.mxu0
      %v1038 = vadd.f32 0.0, %v1037
      %v1039 = vpop.f32.mrf.mxu0
      %v1040 = vpop.f32.mrf.mxu0
      %v1041 = vadd.f32 0.0, %v1040
      %v1042 = vpop.f32.mrf.mxu0
      %1043 = vmatprep.mubr.bf16.mxu0 0
      %1044 = vmatmul.mubr.bf16.gmra.mxu0 %v664
      %v1045 = vpop.f32.mrf.mxu0
      %v1046 = vadd.f32 0.0, %v1045
      %v1047 = vpop.f32.mrf.mxu0
      %v1048 = vpop.f32.mrf.mxu0
      %v1049 = vadd.f32 0.0, %v1048
      %v1050 = vpop.f32.mrf.mxu0
      %1051 = vmatprep.mubr.bf16.mxu0 0
      %1052 = vmatmul.mubr.bf16.gmra.mxu0 %v667
      %v1053 = vpop.f32.mrf.mxu0
      %v1054 = vadd.f32 0.0, %v1053
      %v1055 = vpop.f32.mrf.mxu0
      %v1056 = vpop.f32.mrf.mxu0
      %v1057 = vadd.f32 0.0, %v1056
      %v1058 = vpop.f32.mrf.mxu0
      %1059 = vmatprep.mubr.bf16.mxu0 0
      %1060 = vmatmul.mubr.bf16.gmra.mxu0 %v670
      %v1061 = vpop.f32.mrf.mxu0
      %v1062 = vadd.f32 0.0, %v1061
      %v1063 = vpop.f32.mrf.mxu0
      %v1064 = vpop.f32.mrf.mxu0
      %v1065 = vadd.f32 0.0, %v1064
      %v1066 = vpop.f32.mrf.mxu0
      %1067 = vmatprep.mubr.bf16.mxu0 0
      %1068 = vmatmul.mubr.bf16.gmra.mxu0 %v673
      %v1069 = vpop.f32.mrf.mxu0
      %v1070 = vadd.f32 0.0, %v1069
      %v1071 = vpop.f32.mrf.mxu0
      %v1072 = vpop.f32.mrf.mxu0
      %v1073 = vadd.f32 0.0, %v1072
      %v1074 = vpop.f32.mrf.mxu0
      %1075 = vmatprep.mubr.bf16.mxu0 0
      %1076 = vmatmul.mubr.bf16.gmra.mxu0 %v676
      %v1077 = vpop.f32.mrf.mxu0
      %v1078 = vadd.f32 0.0, %v1077
      %v1079 = vpop.f32.mrf.mxu0
      %v1080 = vpop.f32.mrf.mxu0
      %v1081 = vadd.f32 0.0, %v1080
      %v1082 = vpop.f32.mrf.mxu0
      %1083 = vmatprep.mubr.bf16.mxu0 0
      %1084 = vmatmul.mubr.bf16.gmra.mxu0 %v679
      %v1085 = vpop.f32.mrf.mxu0
      %v1086 = vadd.f32 0.0, %v1085
      %v1087 = vpop.f32.mrf.mxu0
      %v1088 = vpop.f32.mrf.mxu0
      %v1089 = vadd.f32 0.0, %v1088
      %v1090 = vpop.f32.mrf.mxu0
      %1091 = vmatprep.mubr.bf16.mxu0 0
      %1092 = vmatmul.mubr.bf16.gmra.mxu0 %v682
      %v1093 = vpop.f32.mrf.mxu0
      %v1094 = vadd.f32 0.0, %v1093
      %v1095 = vpop.f32.mrf.mxu0
      %v1096 = vpop.f32.mrf.mxu0
      %v1097 = vadd.f32 0.0, %v1096
      %v1098 = vpop.f32.mrf.mxu0
      %1099 = vmatprep.mubr.bf16.mxu0 0
      %1100 = vmatmul.mubr.bf16.gmra.mxu0 %v685
      %v1101 = vpop.f32.mrf.mxu0
      %v1102 = vadd.f32 0.0, %v1101
      %v1103 = vpop.f32.mrf.mxu0
      %v1104 = vpop.f32.mrf.mxu0
      %v1105 = vadd.f32 0.0, %v1104
      %v1106 = vpop.f32.mrf.mxu0
      %1107 = vmatprep.mubr.bf16.mxu0 0
      %1108 = vmatmul.mubr.bf16.gmra.mxu0 %v688
      %v1109 = vpop.f32.mrf.mxu0
      %v1110 = vadd.f32 0.0, %v1109
      %v1111 = vpop.f32.mrf.mxu0
      %v1112 = vpop.f32.mrf.mxu0
      %v1113 = vadd.f32 0.0, %v1112
      %v1114 = vpop.f32.mrf.mxu0
      %1115 = vmatprep.mubr.bf16.mxu0 0
      %1116 = vmatmul.mubr.bf16.gmra.mxu0 %v691
      %v1117 = vpop.f32.mrf.mxu0
      %v1118 = vadd.f32 0.0, %v1117
      %v1119 = vpop.f32.mrf.mxu0
      %v1120 = vpop.f32.mrf.mxu0
      %v1121 = vadd.f32 0.0, %v1120
      %v1122 = vpop.f32.mrf.mxu0
      %1123 = vmatprep.mubr.bf16.mxu0 0
      %1124 = vmatmul.mubr.bf16.gmra.mxu0 %v694
      %v1125 = vpop.f32.mrf.mxu0
      %v1126 = vadd.f32 0.0, %v1125
      %v1127 = vpop.f32.mrf.mxu0
      %v1128 = vpop.f32.mrf.mxu0
      %v1129 = vadd.f32 0.0, %v1128
      %v1130 = vpop.f32.mrf.mxu0
      %1131 = vmatprep.mubr.bf16.mxu0 0
      %1132 = vmatmul.mubr.bf16.gmra.mxu0 %v697
      %v1133 = vpop.f32.mrf.mxu0
      %v1134 = vadd.f32 0.0, %v1133
      %v1135 = vpop.f32.mrf.mxu0
      %v1136 = vpop.f32.mrf.mxu0
      %v1137 = vadd.f32 0.0, %v1136
      %v1138 = vpop.f32.mrf.mxu0
      %1139 = vmatprep.mubr.bf16.mxu0 0
      %1140 = vmatmul.mubr.bf16.gmra.mxu0 %v700
      %v1141 = vpop.f32.mrf.mxu0
      %v1142 = vadd.f32 0.0, %v1141
      %v1143 = vpop.f32.mrf.mxu0
      %v1144 = vpop.f32.mrf.mxu0
      %v1145 = vadd.f32 0.0, %v1144
      %v1146 = vpop.f32.mrf.mxu0
      %1147 = vmatprep.mubr.bf16.mxu0 0
      %1148 = vmatmul.mubr.bf16.gmra.mxu0 %v703
      %v1149 = vpop.f32.mrf.mxu0
      %v1150 = vadd.f32 0.0, %v1149
      %v1151 = vpop.f32.mrf.mxu0
      %v1152 = vpop.f32.mrf.mxu0
      %v1153 = vadd.f32 0.0, %v1152
      %v1154 = vpop.f32.mrf.mxu0
      %1155 = vmatprep.mubr.bf16.mxu0 0
      %1156 = vmatmul.mubr.bf16.gmra.mxu0 %v706
      %v1157 = vpop.f32.mrf.mxu0
      %v1158 = vadd.f32 0.0, %v1157
      %v1159 = vpop.f32.mrf.mxu0
      %v1160 = vpop.f32.mrf.mxu0
      %v1161 = vadd.f32 0.0, %v1160
      %v1162 = vpop.f32.mrf.mxu0
      %1163 = vdwg.mxu0
      %v1164 = vmax.f32 %v750, %v854
      %v1165 = vmax.f32 %v753, %v857
      %v1166 = vmax.f32 %v758, %v862
      %v1167 = vmax.f32 %v761, %v865
      %v1168 = vmax.f32 %v766, %v870
      %v1169 = vmax.f32 %v769, %v873
      %v1170 = vmax.f32 %v774, %v878
      %v1171 = vmax.f32 %v777, %v881
      %v1172 = vmax.f32 %v782, %v886
      %v1173 = vmax.f32 %v785, %v889
      %v1174 = vmax.f32 %v790, %v894
      %v1175 = vmax.f32 %v793, %v897
      %v1176 = vmax.f32 %v798, %v902
      %v1177 = vmax.f32 %v801, %v905
      %v1178 = vmax.f32 %v806, %v910
      %v1179 = vmax.f32 %v809, %v913
      %v1180 = vmax.f32 %v814, %v918
      %v1181 = vmax.f32 %v817, %v921
      %v1182 = vmax.f32 %v822, %v926
      %v1183 = vmax.f32 %v825, %v929
      %v1184 = vmax.f32 %v830, %v934
      %v1185 = vmax.f32 %v833, %v937
      %v1186 = vmax.f32 %v838, %v942
      %v1187 = vmax.f32 %v841, %v945
      %v1188 = vmax.f32 %v846, %v950
      %v1189 = vmax.f32 %v849, %v953
      %v1190 = vmax.f32 %v1164, %v958
      %v1191 = vmax.f32 %v1165, %v961
      %v1192 = vmax.f32 %v1166, %v966
      %v1193 = vmax.f32 %v1167, %v969
      %v1194 = vmax.f32 %v1168, %v974
      %v1195 = vmax.f32 %v1169, %v977
      %v1196 = vmax.f32 %v1170, %v982
      %v1197 = vmax.f32 %v1171, %v985
      %v1198 = vmax.f32 %v1172, %v990
      %v1199 = vmax.f32 %v1173, %v993
      %v1200 = vmax.f32 %v1174, %v998
      %v1201 = vmax.f32 %v1175, %v1001
      %v1202 = vmax.f32 %v1176, %v1006
      %v1203 = vmax.f32 %v1177, %v1009
      %v1204 = vmax.f32 %v1178, %v1014
      %v1205 = vmax.f32 %v1179, %v1017
      %v1206 = vmax.f32 %v1180, %v1022
      %v1207 = vmax.f32 %v1181, %v1025
      %v1208 = vmax.f32 %v1182, %v1030
      %v1209 = vmax.f32 %v1183, %v1033
      %v1210 = vmax.f32 %v1184, %v1038
      %v1211 = vmax.f32 %v1185, %v1041
      %v1212 = vmax.f32 %v1186, %v1046
      %v1213 = vmax.f32 %v1187, %v1049
      %v1214 = vmax.f32 %v1188, %v1054
      %v1215 = vmax.f32 %v1189, %v1057
      %v1216 = vmax.f32 %v1190, %v1062
      %v1217 = vmax.f32 %v1191, %v1065
      %v1218 = vmax.f32 %v1192, %v1070
      %v1219 = vmax.f32 %v1193, %v1073
      %v1220 = vmax.f32 %v1194, %v1078
      %v1221 = vmax.f32 %v1195, %v1081
      %v1222 = vmax.f32 %v1196, %v1086
      %v1223 = vmax.f32 %v1197, %v1089
      %v1224 = vmax.f32 %v1198, %v1094
      %v1225 = vmax.f32 %v1199, %v1097
      %v1226 = vmax.f32 %v1200, %v1102
      %v1227 = vmax.f32 %v1201, %v1105
      %v1228 = vmax.f32 %v1202, %v1110
      %v1229 = vmax.f32 %v1203, %v1113
      %v1230 = vmax.f32 %v1204, %v1118
      %v1231 = vmax.f32 %v1205, %v1121
      %v1232 = vmax.f32 %v1206, %v1126
      %v1233 = vmax.f32 %v1207, %v1129
      %v1234 = vmax.f32 %v1208, %v1134
      %v1235 = vmax.f32 %v1209, %v1137
      %v1236 = vmax.f32 %v1210, %v1142
      %v1237 = vmax.f32 %v1211, %v1145
      %v1238 = vmax.f32 %v1212, %v1150
      %v1239 = vmax.f32 %v1213, %v1153
      %v1240 = vmax.f32 %v1214, %v1158
      %v1241 = vmax.f32 %v1215, %v1161
      %v1242 = vld [vmem:[%s2] sm:$0x1]
      %v1244 = vlaneseq
      %v1245 = vshrl.u32 %v1244, 7
      %v1246 = vsub.s32 0, %v1245
      %v1247 = vrot.slane %v1242, %v1246
      %v1249 = vadd.f32 %v1216, %v1247
      %v1250 = vadd.f32 %v1217, %v1247
      %v1251 = vadd.f32 %v1218, %v1247
      %v1252 = vadd.f32 %v1219, %v1247
      %v1253 = vadd.f32 %v1220, %v1247
      %v1254 = vadd.f32 %v1221, %v1247
      %v1255 = vadd.f32 %v1222, %v1247
      %v1256 = vadd.f32 %v1223, %v1247
      %v1257 = vadd.f32 %v1224, %v1247
      %v1258 = vadd.f32 %v1225, %v1247
      %v1259 = vadd.f32 %v1226, %v1247
      %v1260 = vadd.f32 %v1227, %v1247
      %v1261 = vadd.f32 %v1228, %v1247
      %v1262 = vadd.f32 %v1229, %v1247
      %v1263 = vadd.f32 %v1230, %v1247
      %v1264 = vadd.f32 %v1231, %v1247
      %v1265 = vadd.f32 %v1232, %v1247
      %v1266 = vadd.f32 %v1233, %v1247
      %v1267 = vadd.f32 %v1234, %v1247
      %v1268 = vadd.f32 %v1235, %v1247
      %v1269 = vadd.f32 %v1236, %v1247
      %v1270 = vadd.f32 %v1237, %v1247
      %v1271 = vadd.f32 %v1238, %v1247
      %v1272 = vadd.f32 %v1239, %v1247
      %v1273 = vadd.f32 %v1240, %v1247
      %v1274 = vadd.f32 %v1241, %v1247
      %v1275 = vmax.f32 %v1249, 0.0
      %v1276 = vmax.f32 %v1250, 0.0
      %v1277 = vmax.f32 %v1251, 0.0
      %v1278 = vmax.f32 %v1252, 0.0
      %v1279 = vmax.f32 %v1253, 0.0
      %v1280 = vmax.f32 %v1254, 0.0
      %v1281 = vmax.f32 %v1255, 0.0
      %v1282 = vmax.f32 %v1256, 0.0
      %v1283 = vmax.f32 %v1257, 0.0
      %v1284 = vmax.f32 %v1258, 0.0
      %v1285 = vmax.f32 %v1259, 0.0
      %v1286 = vmax.f32 %v1260, 0.0
      %v1287 = vmax.f32 %v1261, 0.0
      %v1288 = vmax.f32 %v1262, 0.0
      %v1289 = vmax.f32 %v1263, 0.0
      %v1290 = vmax.f32 %v1264, 0.0
      %v1291 = vmax.f32 %v1265, 0.0
      %v1292 = vmax.f32 %v1266, 0.0
      %v1293 = vmax.f32 %v1267, 0.0
      %v1294 = vmax.f32 %v1268, 0.0
      %v1295 = vmax.f32 %v1269, 0.0
      %v1296 = vmax.f32 %v1270, 0.0
      %v1297 = vmax.f32 %v1271, 0.0
      %v1298 = vmax.f32 %v1272, 0.0
      %v1299 = vmax.f32 %v1273, 0.0
      %v1300 = vmax.f32 %v1274, 0.0
      %v1301 = vpack.c.bf16 %v1276, %v1275
      %v1302 = vpack.c.bf16 %v1278, %v1277
      %v1303 = vpack.c.bf16 %v1280, %v1279
      %v1304 = vpack.c.bf16 %v1282, %v1281
      %v1305 = vpack.c.bf16 %v1284, %v1283
      %v1306 = vpack.c.bf16 %v1286, %v1285
      %v1307 = vpack.c.bf16 %v1288, %v1287
      %v1308 = vpack.c.bf16 %v1290, %v1289
      %v1309 = vpack.c.bf16 %v1292, %v1291
      %v1310 = vpack.c.bf16 %v1294, %v1293
      %v1311 = vpack.c.bf16 %v1296, %v1295
      %v1312 = vpack.c.bf16 %v1298, %v1297
      %v1313 = vpack.c.bf16 %v1300, %v1299
      %v1327 = vunpack.c.l.b16 %v1301
      %v1328 = vunpack.c.h.b16 %v1301
      %v1329 = vunpack.c.l.b16 %v1302
      %v1330 = vunpack.c.h.b16 %v1302
      %v1331 = vunpack.c.l.b16 %v1303
      %v1332 = vunpack.c.h.b16 %v1303
      %v1333 = vunpack.c.l.b16 %v1304
      %v1334 = vunpack.c.h.b16 %v1304
      %v1335 = vunpack.c.l.b16 %v1305
      %v1336 = vunpack.c.h.b16 %v1305
      %v1337 = vunpack.c.l.b16 %v1306
      %v1338 = vunpack.c.h.b16 %v1306
      %v1339 = vunpack.c.l.b16 %v1307
      %v1340 = vunpack.c.h.b16 %v1307
      %v1341 = vunpack.c.l.b16 %v1308
      %v1342 = vunpack.c.h.b16 %v1308
      %v1343 = vunpack.c.l.b16 %v1309
      %v1344 = vunpack.c.h.b16 %v1309
      %v1345 = vunpack.c.l.b16 %v1310
      %v1346 = vunpack.c.h.b16 %v1310
      %v1347 = vunpack.c.l.b16 %v1311
      %v1348 = vunpack.c.h.b16 %v1311
      %v1349 = vunpack.c.l.b16 %v1312
      %v1350 = vunpack.c.h.b16 %v1312
      %v1351 = vunpack.c.l.b16 %v1313
      %v1352 = vunpack.c.h.b16 %v1313
      %v1353 = vpack.c.b16 %v1327, %v1327
      %v1354 = vpack.c.b16 %v1328, %v1328
      %v1355 = vpack.c.b16 %v1329, %v1329
      %v1356 = vpack.c.b16 %v1330, %v1330
      %v1357 = vpack.c.b16 %v1331, %v1331
      %v1358 = vpack.c.b16 %v1332, %v1332
      %v1359 = vpack.c.b16 %v1333, %v1333
      %v1360 = vpack.c.b16 %v1334, %v1334
      %v1361 = vpack.c.b16 %v1335, %v1335
      %v1362 = vpack.c.b16 %v1336, %v1336
      %v1363 = vpack.c.b16 %v1337, %v1337
      %v1364 = vpack.c.b16 %v1338, %v1338
      %v1365 = vpack.c.b16 %v1339, %v1339
      %v1366 = vpack.c.b16 %v1340, %v1340
      %v1367 = vpack.c.b16 %v1341, %v1341
      %v1368 = vpack.c.b16 %v1342, %v1342
      %v1369 = vpack.c.b16 %v1343, %v1343
      %v1370 = vpack.c.b16 %v1344, %v1344
      %v1371 = vpack.c.b16 %v1345, %v1345
      %v1372 = vpack.c.b16 %v1346, %v1346
      %v1373 = vpack.c.b16 %v1347, %v1347
      %v1374 = vpack.c.b16 %v1348, %v1348
      %v1375 = vpack.c.b16 %v1349, %v1349
      %v1376 = vpack.c.b16 %v1350, %v1350
      %v1377 = vpack.c.b16 %v1351, %v1351
      %v1378 = vpack.c.b16 %v1352, %v1352
      %1405 = vst [vmem:[%s170] sm:$0xf] %v1353
      %1406 = vst [vmem:[%s170 + $0x4] sm:$0xf] %v1354
      %1407 = vst [vmem:[%s170 + $0x8] sm:$0xf] %v1355
      %1408 = vst [vmem:[%s170 + $0xc] sm:$0xf] %v1356
      %1409 = vst [vmem:[%s170 + $0x10] sm:$0xf] %v1357
      %1410 = vst [vmem:[%s170 + $0x14] sm:$0xf] %v1358
      %1411 = vst [vmem:[%s170 + $0x18] sm:$0xf] %v1359
      %1412 = vst [vmem:[%s170 + $0x1c] sm:$0xf] %v1360
      %1413 = vst [vmem:[%s170 + $0x20] sm:$0xf] %v1361
      %1414 = vst [vmem:[%s170 + $0x24] sm:$0xf] %v1362
      %1415 = vst [vmem:[%s170 + $0x28] sm:$0xf] %v1363
      %1416 = vst [vmem:[%s170 + $0x2c] sm:$0xf] %v1364
      %1417 = vst [vmem:[%s170 + $0x30] sm:$0xf] %v1365
      %1418 = vst [vmem:[%s170 + $0x34] sm:$0xf] %v1366
      %1419 = vst [vmem:[%s170 + $0x38] sm:$0xf] %v1367
      %1420 = vst [vmem:[%s170 + $0x3c] sm:$0xf] %v1368
      %1421 = vst [vmem:[%s170 + $0x40] sm:$0xf] %v1369
      %1422 = vst [vmem:[%s170 + $0x44] sm:$0xf] %v1370
      %1423 = vst [vmem:[%s170 + $0x48] sm:$0xf] %v1371
      %1424 = vst [vmem:[%s170 + $0x4c] sm:$0xf] %v1372
      %1425 = vst [vmem:[%s170 + $0x50] sm:$0xf] %v1373
      %1426 = vst [vmem:[%s170 + $0x54] sm:$0xf] %v1374
      %1427 = vst [vmem:[%s170 + $0x58] sm:$0xf] %v1375
      %1428 = vst [vmem:[%s170 + $0x5c] sm:$0xf] %v1376
      %1429 = vst [vmem:[%s170 + $0x60] sm:$0xf] %v1377
      %1430 = vst [vmem:[%s170 + $0x64] sm:$0xf] %v1378
      %p1431 = scmp.lt.s32.totalorder %s14, 1
      %s1432 = scalar_select %p1431, %s14, 1
      %s1433 = smul.addr %s1432, 26
      %s1434 = smul.addr %s1433, 4
      %s1435 = scalar_lea.vmem %s3, %s1434
      // Predicated region
      $region33: #{lenet_forward.3} parent=31 // pred_check
        %p1436 = pneg %p100
      $region34: #{lenet_forward.3} parent=31 // pred_check_branch
        %1438 = sbr.rel (%p1436) target = $region36
      $region35: #{lenet_forward.3} parent=31 // pred_region
        _
      $region36: #{lenet_forward.3} parent=31 // pred_fallthru
        _
    $region32: #{lenet_forward.3} parent=5 // pred_fallthru
      _
    %p1439 = scmp.le.s32.totalorder 2, %s9
    // Predicated region
    $region37: #{lenet_forward.3} parent=5 // pred_check
      %p1440 = pneg %p1439
    $region38: #{lenet_forward.3} parent=5 // pred_check_branch
      %1442 = sbr.rel (%p1440) target = $region40
    $region39: #{lenet_forward.3} parent=5 // pred_region
      %s1443 = ssub.s32 %s9, 2
      // Predicated region
      $region41: #{lenet_forward.3} parent=39 // pred_check
        %p1444 = pneg %p106
      $region42: #{lenet_forward.3} parent=39 // pred_check_branch
        %1446 = sbr.rel (%p1444) target = $region44
      $region43: #{lenet_forward.3} parent=39 // pred_region
        %p1447 = scmp.lt.s32.totalorder %s15, 1
        %s1448 = scalar_select %p1447, %s15, 1
        %s1449 = smul.addr %s1448, 26
        %s1450 = smul.addr %s1449, 4
        %s1451 = scalar_lea.vmem %s3, %s1450
      $region44: #{lenet_forward.3} parent=39 // pred_fallthru
        _
    $region40: #{lenet_forward.3} parent=5 // pred_fallthru
      _
  $region6: #{lenet_forward.3} parent=0 // loop_footer
    %s13 = sadd.s32 1, %s9
  $region7: #{lenet_forward.3} parent=0 // loop_footer_branch
    %8 = sbr.rel target = $region3
  $region8: #{lenet_forward.3} parent=0 // loop_exit
    _

// kernel: lenet_forward.4
$region0: #{lenet_forward.4}
  #allocation0 [shape = 'u32[]', space=smem, size = 0x4, offset = 0x4, fixed_abs, tag = 'smem constant byte address 0x4 - core index']
  #allocation1 [shape = 'u32[144,128]{1,0:T(1,128)}', space=vmem, size = 0x12000, scoped, tag = 'internal scratch']
  %s0 = inlined_call_operand.vmem [shape: bf16[2,128,150], index: 0, kind: input, shape index: {}]
  %s1 = inlined_call_operand.vmem [shape: bf16[150,128], index: 1, kind: input, shape index: {}]
  %s2 = inlined_call_operand.vmem [shape: f32[1,128], index: 2, kind: input, shape index: {}]
  %s3 = inlined_call_operand.vmem [shape: bf16[2,32,128], index: 3, kind: output, shape index: {}]
  %s4 = sld [smem:[#allocation0]]
  $region45: #{lenet_forward.4} parent=0
    _
  %s6 = ssub.s32 1, %s4
  %s7 = scalar_select 0, %s6, %s4
  loop: start=0, step=1, limit=4
  $region2: #{lenet_forward.4} parent=0 // loop_pre_header
    _
  $region3: #{lenet_forward.4} parent=0 // loop_header
    %s9 = sphi 0, %s13
    %p10 = scmp.ge.s32.totalorder %s9, 4
    %s19 = sphi 0, %s21
    %s22 = sphi 0, %s19
    %s23 = sphi 0, %s22
    %s39 = sphi 0, %s23
    %s43 = sphi 0, %s43
    %s45 = sphi 0, %s43
    %s46 = sphi 0, %s45
    %s60 = sphi 0, %s46
    %s64 = sphi 0, %s64
    %s66 = sphi 0, %s64
    %s67 = sphi 0, %s66
    %s81 = sphi 0, %s67
    %s87 = sphi 0, %s89
    %s90 = sphi 0, %s87
    %s91 = sphi 0, %s90
    %s107 = sphi 0, %s91
  $region4: #{lenet_forward.4} parent=0 // loop_header_branch
    %12 = sbr.rel (%p10) target = $region8
  $region5: #{lenet_forward.4} parent=0 // loop_body
    %s14 = ssub.s32 %s9, 1
    %s15 = ssub.s32 %s9, 2
    %s16 = sadd.s32 %s9, 1
    %s17 = ssub.s32 %s9, %s16
    %p18 = scmp.eq.s32.totalorder %s17, 0
    %s20 = sadd.s32 %s19, 1
    %s21 = scalar_select %p18, %s19, %s20
    %p24 = pneg %p18
    %p25 = scmp.eq.s32.totalorder %s9, 1
    %p26 = por %p24, %p25
    %p27 = scmp.ne.s32.totalorder %s19, %s22
    %p28 = scmp.eq.s32.totalorder %s9, 0
    %p29 = por %p27, %p28
    %p30 = scmp.ne.s32.totalorder %s19, %s22
    %p31 = scmp.eq.s32.totalorder %s14, 1
    %p32 = por %p30, %p31
    %p33 = scmp.ne.s32.totalorder %s22, %s23
    %p34 = scmp.eq.s32.totalorder %s14, 0
    %p35 = por %p33, %p34
    %p36 = scmp.ne.s32.totalorder %s22, %s23
    %p37 = scmp.eq.s32.totalorder %s15, 1
    %p38 = por %p36, %p37
    %p40 = scmp.ne.s32.totalorder %s23, %s39
    %p41 = scmp.eq.s32.totalorder %s15, 0
    %p42 = por %p40, %p41
    %s44 = sadd.s32 %s43, 1
    %p47 = scmp.eq.s32.totalorder %s9, 1
    %p48 = scmp.ne.s32.totalorder %s43, %s45
    %p49 = scmp.eq.s32.totalorder %s9, 0
    %p50 = por %p48, %p49
    %p51 = scmp.ne.s32.totalorder %s43, %s45
    %p52 = scmp.eq.s32.totalorder %s14, 1
    %p53 = por %p51, %p52
    %p54 = scmp.ne.s32.totalorder %s45, %s46
    %p55 = scmp.eq.s32.totalorder %s14, 0
    %p56 = por %p54, %p55
    %p57 = scmp.ne.s32.totalorder %s45, %s46
    %p58 = scmp.eq.s32.totalorder %s15, 1
    %p59 = por %p57, %p58
    %p61 = scmp.ne.s32.totalorder %s46, %s60
    %p62 = scmp.eq.s32.totalorder %s15, 0
    %p63 = por %p61, %p62
    %s65 = sadd.s32 %s64, 1
    %p68 = scmp.eq.s32.totalorder %s9, 1
    %p69 = scmp.ne.s32.totalorder %s64, %s66
    %p70 = scmp.eq.s32.totalorder %s9, 0
    %p71 = por %p69, %p70
    %p72 = scmp.ne.s32.totalorder %s64, %s66
    %p73 = scmp.eq.s32.totalorder %s14, 1
    %p74 = por %p72, %p73
    %p75 = scmp.ne.s32.totalorder %s66, %s67
    %p76 = scmp.eq.s32.totalorder %s14, 0
    %p77 = por %p75, %p76
    %p78 = scmp.ne.s32.totalorder %s66, %s67
    %p79 = scmp.eq.s32.totalorder %s15, 1
    %p80 = por %p78, %p79
    %p82 = scmp.ne.s32.totalorder %s67, %s81
    %p83 = scmp.eq.s32.totalorder %s15, 0
    %p84 = por %p82, %p83
    %s85 = ssub.s32 %s9, %s16
    %p86 = scmp.eq.s32.totalorder %s85, 0
    %s88 = sadd.s32 %s87, 1
    %s89 = scalar_select %p86, %s87, %s88
    %p92 = pneg %p86
    %p93 = scmp.eq.s32.totalorder %s9, 1
    %p94 = por %p92, %p93
    %p95 = scmp.ne.s32.totalorder %s87, %s90
    %p96 = scmp.eq.s32.totalorder %s9, 0
    %p97 = por %p95, %p96
    %p98 = scmp.ne.s32.totalorder %s87, %s90
    %p99 = scmp.eq.s32.totalorder %s14, 1
    %p100 = por %p98, %p99
    %p101 = scmp.ne.s32.totalorder %s90, %s91
    %p102 = scmp.eq.s32.totalorder %s14, 0
    %p103 = por %p101, %p102
    %p104 = scmp.ne.s32.totalorder %s90, %s91
    %p105 = scmp.eq.s32.totalorder %s15, 1
    %p106 = por %p104, %p105
    %p108 = scmp.ne.s32.totalorder %s91, %s107
    %p109 = scmp.eq.s32.totalorder %s15, 0
    %p110 = por %p108, %p109
    %p111 = scmp.le.s32.totalorder 1, %s9
    %p112 = scmp.lt.s32.totalorder %s9, 3
    %p113 = pnand %p111, %p112
    %p114 = pneg %p113
    // Predicated region
    $region9: #{lenet_forward.4} parent=5 // pred_check
      _
    $region10: #{lenet_forward.4} parent=5 // pred_check_branch
      %116 = sbr.rel (%p113) target = $region12
    $region11: #{lenet_forward.4} parent=5 // pred_region
      %s117 = ssub.s32 %s9, 1
      // Predicated region
      $region13: #{lenet_forward.4} parent=11 // pred_check
        %p118 = pneg %p56
      $region14: #{lenet_forward.4} parent=11 // pred_check_branch
        %120 = sbr.rel (%p118) target = $region16
      $region15: #{lenet_forward.4} parent=11 // pred_region
        _
      $region16: #{lenet_forward.4} parent=11 // pred_fallthru
        _
      // Predicated region
      $region17: #{lenet_forward.4} parent=11 // pred_check
        %p121 = pneg %p77
      $region18: #{lenet_forward.4} parent=11 // pred_check_branch
        %123 = sbr.rel (%p121) target = $region20
      $region19: #{lenet_forward.4} parent=11 // pred_region
        _
      $region20: #{lenet_forward.4} parent=11 // pred_fallthru
        _
    $region12: #{lenet_forward.4} parent=5 // pred_fallthru
      _
    %p124 = scmp.lt.s32.totalorder %s9, 2
    // Predicated region
    $region21: #{lenet_forward.4} parent=5 // pred_check
      %p125 = pneg %p124
    $region22: #{lenet_forward.4} parent=5 // pred_check_branch
      %127 = sbr.rel (%p125) target = $region24
    $region23: #{lenet_forward.4} parent=5 // pred_region
      // Predicated region
      $region25: #{lenet_forward.4} parent=23 // pred_check
        %p128 = pneg %p29
      $region26: #{lenet_forward.4} parent=23 // pred_check_branch
        %130 = sbr.rel (%p128) target = $region28
      $region27: #{lenet_forward.4} parent=23 // pred_region
        %p131 = scmp.lt.s32.totalorder %s9, 1
        %s132 = scalar_select %p131, %s9, 1
        %s133 = smul.addr %s132, 32
        %s134 = smul.addr %s133, 4
        %s135 = scalar_lea.vmem %s0, %s134
      $region28: #{lenet_forward.4} parent=23 // pred_fallthru
        _
    $region24: #{lenet_forward.4} parent=5 // pred_fallthru
      _
    %p136 = scmp.le.s32.totalorder 1, %s9
    %p137 = scmp.lt.s32.totalorder %s9, 3
    %p138 = pnand %p136, %p137
    %p139 = pneg %p138
    // Predicated region
    $region29: #{lenet_forward.4} parent=5 // pred_check
      _
    $region30: #{lenet_forward.4} parent=5 // pred_check_branch
      %141 = sbr.rel (%p138) target = $region32
    $region31: #{lenet_forward.4} parent=5 // pred_region
      %s142 = ssub.s32 %s9, 1
      %p143 = scmp.lt.s32.totalorder %s14, 1
      %s144 = scalar_select %p143, %s14, 1
      %s145 = smul.addr %s144, 32
      %s146 = smul.addr %s145, 4
      %s147 = scalar_lea.vmem %s0, %s146
      %p148 = pneg %p35
      %p149 = pneg %p32
      %p150 = pneg %p56
      %p151 = pneg %p53
      %p152 = pneg %p77
      %p153 = pneg %p74
      %p154 = pneg %p103
      %p155 = pneg %p100
      %p156 = scmp.lt.s32.totalorder %s14, 1
      %s157 = scalar_select %p156, %s14, 1
      %s158 = smul.addr %s157, 4
      %s159 = smul.addr %s158, 4
      %s160 = scalar_lea.vmem %s3, %s159
      %p161 = scmp.lt.s32.totalorder %s14, 1
      %s162 = scalar_select %p161, %s14, 1
      %s163 = smul.addr %s162, 32
      %s164 = smul.addr %s163, 4
      %s165 = scalar_lea.vmem %s0, %s164
      %p166 = scmp.lt.s32.totalorder %s14, 1
      %s167 = scalar_select %p166, %s14, 1
      %s168 = smul.addr %s167, 4
      %s169 = smul.addr %s168, 4
      %s170 = scalar_lea.vmem %s3, %s169
      %v172 = vld [vmem:[%s165] sm:$0xff]
      %v173 = vld [vmem:[%s165 + $0x8] sm:$0xff]
      %v174 = vld [vmem:[%s165 + $0x10] sm:$0xff]
      %v175 = vld [vmem:[%s165 + $0x18] sm:$0xff]
      %v176 = vld [vmem:[%s165 + $0x20] sm:$0xff]
      %v177 = vld [vmem:[%s165 + $0x28] sm:$0xff]
      %v178 = vld [vmem:[%s165 + $0x30] sm:$0xff]
      %v179 = vld [vmem:[%s165 + $0x38] sm:$0xff]
      %v180 = vld [vmem:[%s165 + $0x40] sm:$0xff]
      %v181 = vld [vmem:[%s165 + $0x48] sm:$0xff]
      %v182 = vld [vmem:[%s165 + $0x50] sm:$0xff]
      %v183 = vld [vmem:[%s165 + $0x58] sm:$0xff]
      %v184 = vld [vmem:[%s165 + $0x60] sm:$0xff]
      %v185 = vld [vmem:[%s165 + $0x68] sm:$0xff]
      %v186 = vld [vmem:[%s165 + $0x70] sm:$0xff]
      %v187 = vld [vmem:[%s165 + $0x78] sm:$0xff]
      %v188 = vld [vmem:[%s1] sm:$0xf]
      %v189 = vld [vmem:[%s1 + $0x4] sm:$0xf]
      %v190 = vld [vmem:[%s1 + $0x8] sm:$0xf]
      %v191 = vld [vmem:[%s1 + $0xc] sm:$0xf]
      %v192 = vld [vmem:[%s1 + $0x10] sm:$0xf]
      %v193 = vld [vmem:[%s1 + $0x14] sm:$0xf]
      %v194 = vld [vmem:[%s1 + $0x18] sm:$0xf]
      %v195 = vld [vmem:[%s1 + $0x1c] sm:$0xf]
      %v196 = vld [vmem:[%s1 + $0x20] sm:$0xf]
      %v197 = vld [vmem:[%s1 + $0x24] sm:$0xf]
      %v198 = vld [vmem:[%s1 + $0x28] sm:$0xf]
      %v199 = vld [vmem:[%s1 + $0x2c] sm:$0xf]
      %v200 = vld [vmem:[%s1 + $0x30] sm:$0xf]
      %v201 = vld [vmem:[%s1 + $0x34] sm:$0xf]
      %v202 = vld [vmem:[%s1 + $0x38] sm:$0xf]
      %v203 = vld [vmem:[%s1 + $0x3c] sm:$0xf]
      %v204 = vld [vmem:[%s1 + $0x40] sm:$0xf]
      %v205 = vld [vmem:[%s1 + $0x44] sm:$0xf]
      %v206 = vld [vmem:[%s1 + $0x48] sm:$0x7]
      %v223 = vunpack.c.l.b16 %v172
      %v224 = vunpack.c.h.b16 %v172
      %v225 = vunpack.c.l.b16 %v173
      %v226 = vunpack.c.h.b16 %v173
      %v227 = vunpack.c.l.b16 %v174
      %v228 = vunpack.c.h.b16 %v174
      %v229 = vunpack.c.l.b16 %v175
      %v230 = vunpack.c.h.b16 %v175
      %v231 = vunpack.c.l.b16 %v176
      %v232 = vunpack.c.h.b16 %v176
      %v233 = vunpack.c.l.b16 %v177
      %v234 = vunpack.c.h.b16 %v177
      %v235 = vunpack.c.l.b16 %v178
      %v236 = vunpack.c.h.b16 %v178
      %v237 = vunpack.c.l.b16 %v179
      %v238 = vunpack.c.h.b16 %v179
      %v239 = vunpack.c.l.b16 %v180
      %v240 = vunpack.c.h.b16 %v180
      %v241 = vunpack.c.l.b16 %v181
      %v242 = vunpack.c.h.b16 %v181
      %v243 = vunpack.c.l.b16 %v182
      %v244 = vunpack.c.h.b16 %v182
      %v245 = vunpack.c.l.b16 %v183
      %v246 = vunpack.c.h.b16 %v183
      %v247 = vunpack.c.l.b16 %v184
      %v248 = vunpack.c.h.b16 %v184
      %v249 = vunpack.c.l.b16 %v185
      %v250 = vunpack.c.h.b16 %v185
      %v251 = vunpack.c.l.b16 %v186
      %v252 = vunpack.c.h.b16 %v186
      %v253 = vunpack.c.l.b16 %v187
      %v254 = vunpack.c.h.b16 %v187
      %v255 = vpack.c.b16 %v225, %v223
      %v256 = vpack.c.b16 %v226, %v224
      %v257 = vpack.c.b16 %v229, %v227
      %v258 = vpack.c.b16 %v230, %v228
      %v259 = vpack.c.b16 %v233, %v231
      %v260 = vpack.c.b16 %v234, %v232
      %v261 = vpack.c.b16 %v237, %v235
      %v262 = vpack.c.b16 %v238, %v236
      %v263 = vpack.c.b16 %v241, %v239
      %v264 = vpack.c.b16 %v242, %v240
      %v265 = vpack.c.b16 %v245, %v243
      %v266 = vpack.c.b16 %v246, %v244
      %v267 = vpack.c.b16 %v249, %v247
      %v268 = vpack.c.b16 %v250, %v248
      %v269 = vpack.c.b16 %v253, %v251
      %v270 = vpack.c.b16 %v254, %v252
      %v298 = vunpack.c.l.b16 %v188
      %v299 = vunpack.c.l.b16 %v189
      %v300 = vunpack.c.l.b16 %v190
      %v301 = vunpack.c.l.b16 %v191
      %v302 = vunpack.c.l.b16 %v192
      %v303 = vunpack.c.l.b16 %v193
      %v304 = vunpack.c.l.b16 %v194
      %v305 = vunpack.c.l.b16 %v195
      %v306 = vunpack.c.l.b16 %v196
      %v307 = vunpack.c.l.b16 %v197
      %v308 = vunpack.c.l.b16 %v198
      %v309 = vunpack.c.l.b16 %v199
      %v310 = vunpack.c.l.b16 %v200
      %v311 = vunpack.c.l.b16 %v201
      %v312 = vunpack.c.l.b16 %v202
      %v313 = vunpack.c.l.b16 %v203
      %v314 = vunpack.c.l.b16 %v204
      %v315 = vunpack.c.l.b16 %v205
      %v316 = vunpack.c.l.b16 %v206
      %v317 = vpack.c.b16 %v299, %v298
      %v318 = vpack.c.b16 %v301, %v300
      %v319 = vpack.c.b16 %v303, %v302
      %v320 = vpack.c.b16 %v305, %v304
      %v321 = vpack.c.b16 %v307, %v306
      %v322 = vpack.c.b16 %v309, %v308
      %v323 = vpack.c.b16 %v311, %v310
      %v324 = vpack.c.b16 %v313, %v312
      %v325 = vpack.c.b16 %v315, %v314
      %v326 = vpack.c.b16 %v316, %v316
      %vm336 = vcmask 179200
      %v338 = vsel %vm336, %v256, 0
      %v341 = vsel %vm336, %v258, 0
      %v344 = vsel %vm336, %v260, 0
      %v347 = vsel %vm336, %v262, 0
      %v350 = vsel %vm336, %v264, 0
      %v353 = vsel %vm336, %v266, 0
      %v356 = vsel %vm336, %v268, 0
      %v359 = vsel %vm336, %v270, 0
      %vm361 = vcmask 1042432
      %v363 = vsel %vm361, %v326, 0
      %365 = vmatprep.subr.bf16.mxu0 0
      %366 = vmatpush1.bf16.msra.mxu0 %v324
      %367 = vmatprep.subr.bf16.mxu0 0
      %368 = vmatpush1.bf16.msra.mxu0 %v323
      %369 = vmatprep.subr.bf16.mxu0 0
      %370 = vmatpush1.bf16.msra.mxu0 %v322
      %371 = vmatprep.subr.bf16.mxu0 0
      %372 = vmatpush1.bf16.msra.mxu0 %v321
      %373 = vmatprep.subr.bf16.mxu0 0
      %374 = vmatpush1.bf16.msra.mxu0 %v320
      %375 = vmatprep.subr.bf16.mxu0 0
      %376 = vmatpush1.bf16.msra.mxu0 %v319
      %377 = vmatprep.subr.bf16.mxu0 0
      %378 = vmatpush1.bf16.msra.mxu0 %v318
      %379 = vmatprep.subr.bf16.mxu0 0
      %380 = vmatpush1.bf16.msra.mxu0 %v317
      %381 = vmatprep.subr.bf16.mxu0 0
      %382 = vmatpush2.bf16.msra.mxu0 0
      %383 = vmatprep.subr.bf16.mxu0 0
      %384 = vmatpush2.bf16.msra.mxu0 0
      %385 = vmatprep.subr.bf16.mxu0 0
      %386 = vmatpush2.bf16.msra.mxu0 0
      %387 = vmatprep.subr.bf16.mxu0 0
      %388 = vmatpush2.bf16.msra.mxu0 0
      %389 = vmatprep.subr.bf16.mxu0 0
      %390 = vmatpush2.bf16.msra.mxu0 0
      %391 = vmatprep.subr.bf16.mxu0 0
      %392 = vmatpush2.bf16.msra.mxu0 0
      %393 = vmatprep.subr.bf16.mxu0 0
      %394 = vmatpush2.bf16.msra.mxu0 %v363
      %395 = vmatprep.subr.bf16.mxu0 0
      %396 = vmatpush2.bf16.msra.mxu0 %v325
      %397 = vmatprep.mubr.bf16.mxu0 %v338
      %398 = vmatmul.mubr.bf16.gmra.mxu0 %v255
      %v399 = vpop.f32.mrf.mxu0
      %v400 = vadd.f32 0.0, %v399
      %v401 = vpop.f32.mrf.mxu0
      %v402 = vpop.f32.mrf.mxu0
      %v403 = vadd.f32 0.0, %v402
      %v404 = vpop.f32.mrf.mxu0
      %405 = vmatprep.mubr.bf16.mxu0 %v341
      %406 = vmatmul.mubr.bf16.gmra.mxu0 %v257
      %v407 = vpop.f32.mrf.mxu0
      %v408 = vadd.f32 0.0, %v407
      %v409 = vpop.f32.mrf.mxu0
      %v410 = vpop.f32.mrf.mxu0
      %v411 = vadd.f32 0.0, %v410
      %v412 = vpop.f32.mrf.mxu0
      %413 = vmatprep.mubr.bf16.mxu0 %v344
      %414 = vmatmul.mubr.bf16.gmra.mxu0 %v259
      %v415 = vpop.f32.mrf.mxu0
      %v416 = vadd.f32 0.0, %v415
      %v417 = vpop.f32.mrf.mxu0
      %v418 = vpop.f32.mrf.mxu0
      %v419 = vadd.f32 0.0, %v418
      %v420 = vpop.f32.mrf.mxu0
      %421 = vmatprep.mubr.bf16.mxu0 %v347
      %422 = vmatmul.mubr.bf16.gmra.mxu0 %v261
      %v423 = vpop.f32.mrf.mxu0
      %v424 = vadd.f32 0.0, %v423
      %v425 = vpop.f32.mrf.mxu0
      %v426 = vpop.f32.mrf.mxu0
      %v427 = vadd.f32 0.0, %v426
      %v428 = vpop.f32.mrf.mxu0
      %429 = vmatprep.mubr.bf16.mxu0 %v350
      %430 = vmatmul.mubr.bf16.gmra.mxu0 %v263
      %v431 = vpop.f32.mrf.mxu0
      %v432 = vadd.f32 0.0, %v431
      %v433 = vpop.f32.mrf.mxu0
      %v434 = vpop.f32.mrf.mxu0
      %v435 = vadd.f32 0.0, %v434
      %v436 = vpop.f32.mrf.mxu0
      %437 = vmatprep.mubr.bf16.mxu0 %v353
      %438 = vmatmul.mubr.bf16.gmra.mxu0 %v265
      %v439 = vpop.f32.mrf.mxu0
      %v440 = vadd.f32 0.0, %v439
      %v441 = vpop.f32.mrf.mxu0
      %v442 = vpop.f32.mrf.mxu0
      %v443 = vadd.f32 0.0, %v442
      %v444 = vpop.f32.mrf.mxu0
      %445 = vmatprep.mubr.bf16.mxu0 %v356
      %446 = vmatmul.mubr.bf16.gmra.mxu0 %v267
      %v447 = vpop.f32.mrf.mxu0
      %v448 = vadd.f32 0.0, %v447
      %v449 = vpop.f32.mrf.mxu0
      %v450 = vpop.f32.mrf.mxu0
      %v451 = vadd.f32 0.0, %v450
      %v452 = vpop.f32.mrf.mxu0
      %453 = vmatprep.mubr.bf16.mxu0 %v359
      %454 = vmatmul.mubr.bf16.gmra.mxu0 %v269
      %v455 = vpop.f32.mrf.mxu0
      %v456 = vadd.f32 0.0, %v455
      %v457 = vpop.f32.mrf.mxu0
      %v458 = vpop.f32.mrf.mxu0
      %v459 = vadd.f32 0.0, %v458
      %v460 = vpop.f32.mrf.mxu0
      %461 = vdwg.mxu0
      %v462 = vmax.f32 %v400, %v416
      %v463 = vmax.f32 %v403, %v419
      %v464 = vmax.f32 %v408, %v424
      %v465 = vmax.f32 %v411, %v427
      %v466 = vmax.f32 %v462, %v432
      %v467 = vmax.f32 %v463, %v435
      %v468 = vmax.f32 %v464, %v440
      %v469 = vmax.f32 %v465, %v443
      %v470 = vmax.f32 %v466, %v448
      %v471 = vmax.f32 %v467, %v451
      %v472 = vmax.f32 %v468, %v456
      %v473 = vmax.f32 %v469, %v459
      %v474 = vld [vmem:[%s2] sm:$0x1]
      %v476 = vlaneseq
      %v477 = vshrl.u32 %v476, 7
      %v478 = vsub.s32 0, %v477
      %v479 = vrot.slane %v474, %v478
      %v481 = vadd.f32 %v470, %v479
      %v482 = vadd.f32 %v471, %v479
      %v483 = vadd.f32 %v472, %v479
      %v484 = vadd.f32 %v473, %v479
      %v485 = vmax.f32 %v481, 0.0
      %v486 = vmax.f32 %v482, 0.0
      %v487 = vmax.f32 %v483, 0.0
      %v488 = vmax.f32 %v484, 0.0
      %v489 = vpack.c.bf16 %v486, %v485
      %v490 = vpack.c.bf16 %v488, %v487
      %v493 = vunpack.c.l.b16 %v489
      %v494 = vunpack.c.h.b16 %v489
      %v495 = vunpack.c.l.b16 %v490
      %v496 = vunpack.c.h.b16 %v490
      %v497 = vpack.c.b16 %v493, %v493
      %v498 = vpack.c.b16 %v494, %v494
      %v499 = vpack.c.b16 %v495, %v495
      %v500 = vpack.c.b16 %v496, %v496
      %505 = vst [vmem:[%s170] sm:$0xf] %v497
      %506 = vst [vmem:[%s170 + $0x4] sm:$0xf] %v498
      %507 = vst [vmem:[%s170 + $0x8] sm:$0xf] %v499
      %508 = vst [vmem:[%s170 + $0xc] sm:$0xf] %v500
      %p509 = scmp.lt.s32.totalorder %s14, 1
      %s510 = scalar_select %p509, %s14, 1
      %s511 = smul.addr %s510, 4
      %s512 = smul.addr %s511, 4
      %s513 = scalar_lea.vmem %s3, %s512
      // Predicated region
      $region33: #{lenet_forward.4} parent=31 // pred_check
        %p514 = pneg %p100
      $region34: #{lenet_forward.4} parent=31 // pred_check_branch
        %516 = sbr.rel (%p514) target = $region36
      $region35: #{lenet_forward.4} parent=31 // pred_region
        _
      $region36: #{lenet_forward.4} parent=31 // pred_fallthru
        _
    $region32: #{lenet_forward.4} parent=5 // pred_fallthru
      _
    %p517 = scmp.le.s32.totalorder 2, %s9
    // Predicated region
    $region37: #{lenet_forward.4} parent=5 // pred_check
      %p518 = pneg %p517
    $region38: #{lenet_forward.4} parent=5 // pred_check_branch
      %520 = sbr.rel (%p518) target = $region40
    $region39: #{lenet_forward.4} parent=5 // pred_region
      %s521 = ssub.s32 %s9, 2
      // Predicated region
      $region41: #{lenet_forward.4} parent=39 // pred_check
        %p522 = pneg %p106
      $region42: #{lenet_forward.4} parent=39 // pred_check_branch
        %524 = sbr.rel (%p522) target = $region44
      $region43: #{lenet_forward.4} parent=39 // pred_region
        %p525 = scmp.lt.s32.totalorder %s15, 1
        %s526 = scalar_select %p525, %s15, 1
        %s527 = smul.addr %s526, 4
        %s528 = smul.addr %s527, 4
        %s529 = scalar_lea.vmem %s3, %s528
      $region44: #{lenet_forward.4} parent=39 // pred_fallthru
        _
    $region40: #{lenet_forward.4} parent=5 // pred_fallthru
      _
  $region6: #{lenet_forward.4} parent=0 // loop_footer
    %s13 = sadd.s32 1, %s9
  $region7: #{lenet_forward.4} parent=0 // loop_footer_branch
    %8 = sbr.rel target = $region3
  $region8: #{lenet_forward.4} parent=0 // loop_exit
    _

// kernel: lenet_forward.5
$region0: #{lenet_forward.5}
  #allocation0 [shape = 'u32[]', space=smem, size = 0x4, offset = 0x4, fixed_abs, tag = 'smem constant byte address 0x4 - core index']
  #allocation1 [shape = 'u32[144,128]{1,0:T(1,128)}', space=vmem, size = 0x12000, scoped, tag = 'internal scratch']
  %s0 = inlined_call_operand.vmem [shape: bf16[16,512], index: 0, kind: input, shape index: {}]
  %s1 = inlined_call_operand.vmem [shape: bf16[512,128], index: 1, kind: input, shape index: {}]
  %s2 = inlined_call_operand.vmem [shape: f32[1,128], index: 2, kind: input, shape index: {}]
  %s3 = inlined_call_operand.vmem [shape: bf16[128,128], index: 3, kind: input, shape index: {}]
  %s4 = inlined_call_operand.vmem [shape: f32[1,128], index: 4, kind: input, shape index: {}]
  %s5 = inlined_call_operand.vmem [shape: bf16[128,128], index: 5, kind: input, shape index: {}]
  %s6 = inlined_call_operand.vmem [shape: f32[1,128], index: 6, kind: input, shape index: {}]
  %s7 = inlined_call_operand.vmem [shape: f32[16,128], index: 7, kind: output, shape index: {}]
  %s8 = sld [smem:[#allocation0]]
  $region38: #{lenet_forward.5} parent=0
    _
  %s10 = ssub.s32 1, %s8
  %s11 = scalar_select 0, %s10, %s8
  // Predicated region
  $region2: #{lenet_forward.5} parent=0 // pred_check
    _
  $region3: #{lenet_forward.5} parent=0 // pred_check_branch
    %13 = sbr.rel (0) target = $region5
  $region4: #{lenet_forward.5} parent=0 // pred_region
    _
  $region5: #{lenet_forward.5} parent=0 // pred_fallthru
    _
  // Predicated region
  $region6: #{lenet_forward.5} parent=0 // pred_check
    _
  $region7: #{lenet_forward.5} parent=0 // pred_check_branch
    %15 = sbr.rel (0) target = $region9
  $region8: #{lenet_forward.5} parent=0 // pred_region
    _
  $region9: #{lenet_forward.5} parent=0 // pred_fallthru
    _
  // Predicated region
  $region10: #{lenet_forward.5} parent=0 // pred_check
    _
  $region11: #{lenet_forward.5} parent=0 // pred_check_branch
    %17 = sbr.rel (0) target = $region13
  $region12: #{lenet_forward.5} parent=0 // pred_region
    _
  $region13: #{lenet_forward.5} parent=0 // pred_fallthru
    _
  // Predicated region
  $region14: #{lenet_forward.5} parent=0 // pred_check
    _
  $region15: #{lenet_forward.5} parent=0 // pred_check_branch
    %19 = sbr.rel (0) target = $region17
  $region16: #{lenet_forward.5} parent=0 // pred_region
    _
  $region17: #{lenet_forward.5} parent=0 // pred_fallthru
    _
  // Predicated region
  $region18: #{lenet_forward.5} parent=0 // pred_check
    _
  $region19: #{lenet_forward.5} parent=0 // pred_check_branch
    %21 = sbr.rel (0) target = $region21
  $region20: #{lenet_forward.5} parent=0 // pred_region
    _
  $region21: #{lenet_forward.5} parent=0 // pred_fallthru
    _
  // Predicated region
  $region22: #{lenet_forward.5} parent=0 // pred_check
    _
  $region23: #{lenet_forward.5} parent=0 // pred_check_branch
    %23 = sbr.rel (0) target = $region25
  $region24: #{lenet_forward.5} parent=0 // pred_region
    _
  $region25: #{lenet_forward.5} parent=0 // pred_fallthru
    _
  // Predicated region
  $region26: #{lenet_forward.5} parent=0 // pred_check
    _
  $region27: #{lenet_forward.5} parent=0 // pred_check_branch
    %25 = sbr.rel (0) target = $region29
  $region28: #{lenet_forward.5} parent=0 // pred_region
    _
  $region29: #{lenet_forward.5} parent=0 // pred_fallthru
    _
  %v27 = vld [vmem:[%s0] sm:$0xff]
  %v28 = vld [vmem:[%s0 + $0x8] sm:$0xff]
  %v29 = vld [vmem:[%s0 + $0x10] sm:$0xff]
  %v30 = vld [vmem:[%s0 + $0x18] sm:$0xff]
  %v31 = vld [vmem:[%s1] sm:$0xf]
  %v32 = vld [vmem:[%s1 + $0x4] sm:$0xf]
  %v33 = vld [vmem:[%s1 + $0x8] sm:$0xf]
  %v34 = vld [vmem:[%s1 + $0xc] sm:$0xf]
  %v35 = vld [vmem:[%s1 + $0x10] sm:$0xf]
  %v36 = vld [vmem:[%s1 + $0x14] sm:$0xf]
  %v37 = vld [vmem:[%s1 + $0x18] sm:$0xf]
  %v38 = vld [vmem:[%s1 + $0x1c] sm:$0xf]
  %v39 = vld [vmem:[%s1 + $0x20] sm:$0xf]
  %v40 = vld [vmem:[%s1 + $0x24] sm:$0xf]
  %v41 = vld [vmem:[%s1 + $0x28] sm:$0xf]
  %v42 = vld [vmem:[%s1 + $0x2c] sm:$0xf]
  %v43 = vld [vmem:[%s1 + $0x30] sm:$0xf]
  %v44 = vld [vmem:[%s1 + $0x34] sm:$0xf]
  %v45 = vld [vmem:[%s1 + $0x38] sm:$0xf]
  %v46 = vld [vmem:[%s1 + $0x3c] sm:$0xf]
  %v47 = vld [vmem:[%s1 + $0x40] sm:$0xf]
  %v48 = vld [vmem:[%s1 + $0x44] sm:$0xf]
  %v49 = vld [vmem:[%s1 + $0x48] sm:$0xf]
  %v50 = vld [vmem:[%s1 + $0x4c] sm:$0xf]
  %v51 = vld [vmem:[%s1 + $0x50] sm:$0xf]
  %v52 = vld [vmem:[%s1 + $0x54] sm:$0xf]
  %v53 = vld [vmem:[%s1 + $0x58] sm:$0xf]
  %v54 = vld [vmem:[%s1 + $0x5c] sm:$0xf]
  %v55 = vld [vmem:[%s1 + $0x60] sm:$0xf]
  %v56 = vld [vmem:[%s1 + $0x64] sm:$0xf]
  %v57 = vld [vmem:[%s1 + $0x68] sm:$0xf]
  %v58 = vld [vmem:[%s1 + $0x6c] sm:$0xf]
  %v59 = vld [vmem:[%s1 + $0x70] sm:$0xf]
  %v60 = vld [vmem:[%s1 + $0x74] sm:$0xf]
  %v61 = vld [vmem:[%s1 + $0x78] sm:$0xf]
  %v62 = vld [vmem:[%s1 + $0x7c] sm:$0xf]
  %v63 = vld [vmem:[%s1 + $0x80] sm:$0xf]
  %v64 = vld [vmem:[%s1 + $0x84] sm:$0xf]
  %v65 = vld [vmem:[%s1 + $0x88] sm:$0xf]
  %v66 = vld [vmem:[%s1 + $0x8c] sm:$0xf]
  %v67 = vld [vmem:[%s1 + $0x90] sm:$0xf]
  %v68 = vld [vmem:[%s1 + $0x94] sm:$0xf]
  %v69 = vld [vmem:[%s1 + $0x98] sm:$0xf]
  %v70 = vld [vmem:[%s1 + $0x9c] sm:$0xf]
  %v71 = vld [vmem:[%s1 + $0xa0] sm:$0xf]
  %v72 = vld [vmem:[%s1 + $0xa4] sm:$0xf]
  %v73 = vld [vmem:[%s1 + $0xa8] sm:$0xf]
  %v74 = vld [vmem:[%s1 + $0xac] sm:$0xf]
  %v75 = vld [vmem:[%s1 + $0xb0] sm:$0xf]
  %v76 = vld [vmem:[%s1 + $0xb4] sm:$0xf]
  %v77 = vld [vmem:[%s1 + $0xb8] sm:$0xf]
  %v78 = vld [vmem:[%s1 + $0xbc] sm:$0xf]
  %v79 = vld [vmem:[%s1 + $0xc0] sm:$0xf]
  %v80 = vld [vmem:[%s1 + $0xc4] sm:$0xf]
  %v81 = vld [vmem:[%s1 + $0xc8] sm:$0xf]
  %v82 = vld [vmem:[%s1 + $0xcc] sm:$0xf]
  %v83 = vld [vmem:[%s1 + $0xd0] sm:$0xf]
  %v84 = vld [vmem:[%s1 + $0xd4] sm:$0xf]
  %v85 = vld [vmem:[%s1 + $0xd8] sm:$0xf]
  %v86 = vld [vmem:[%s1 + $0xdc] sm:$0xf]
  %v87 = vld [vmem:[%s1 + $0xe0] sm:$0xf]
  %v88 = vld [vmem:[%s1 + $0xe4] sm:$0xf]
  %v89 = vld [vmem:[%s1 + $0xe8] sm:$0xf]
  %v90 = vld [vmem:[%s1 + $0xec] sm:$0xf]
  %v91 = vld [vmem:[%s1 + $0xf0] sm:$0xf]
  %v92 = vld [vmem:[%s1 + $0xf4] sm:$0xf]
  %v93 = vld [vmem:[%s1 + $0xf8] sm:$0xf]
  %v94 = vld [vmem:[%s1 + $0xfc] sm:$0xf]
  %v95 = vld [vmem:[%s2] sm:$0x1]
  %v97 = vlaneseq
  %v98 = vshrl.u32 %v97, 7
  %v99 = vsub.s32 0, %v98
  %v100 = vrot.slane %v95, %v99
  %v106 = vunpack.c.l.b16 %v27
  %v107 = vunpack.c.h.b16 %v27
  %v108 = vunpack.c.l.b16 %v28
  %v109 = vunpack.c.h.b16 %v28
  %v110 = vunpack.c.l.b16 %v29
  %v111 = vunpack.c.h.b16 %v29
  %v112 = vunpack.c.l.b16 %v30
  %v113 = vunpack.c.h.b16 %v30
  %v114 = vpack.c.b16 %v110, %v106
  %v115 = vpack.c.b16 %v111, %v107
  %v116 = vpack.c.b16 %v112, %v108
  %v117 = vpack.c.b16 %v113, %v109
  %v186 = vunpack.c.l.b16 %v31
  %v187 = vunpack.c.l.b16 %v32
  %v188 = vunpack.c.l.b16 %v33
  %v189 = vunpack.c.l.b16 %v34
  %v190 = vunpack.c.l.b16 %v35
  %v191 = vunpack.c.l.b16 %v36
  %v192 = vunpack.c.l.b16 %v37
  %v193 = vunpack.c.l.b16 %v38
  %v194 = vunpack.c.l.b16 %v39
  %v195 = vunpack.c.l.b16 %v40
  %v196 = vunpack.c.l.b16 %v41
  %v197 = vunpack.c.l.b16 %v42
  %v198 = vunpack.c.l.b16 %v43
  %v199 = vunpack.c.l.b16 %v44
  %v200 = vunpack.c.l.b16 %v45
  %v201 = vunpack.c.l.b16 %v46
  %v202 = vunpack.c.l.b16 %v47
  %v203 = vunpack.c.l.b16 %v48
  %v204 = vunpack.c.l.b16 %v49
  %v205 = vunpack.c.l.b16 %v50
  %v206 = vunpack.c.l.b16 %v51
  %v207 = vunpack.c.l.b16 %v52
  %v208 = vunpack.c.l.b16 %v53
  %v209 = vunpack.c.l.b16 %v54
  %v210 = vunpack.c.l.b16 %v55
  %v211 = vunpack.c.l.b16 %v56
  %v212 = vunpack.c.l.b16 %v57
  %v213 = vunpack.c.l.b16 %v58
  %v214 = vunpack.c.l.b16 %v59
  %v215 = vunpack.c.l.b16 %v60
  %v216 = vunpack.c.l.b16 %v61
  %v217 = vunpack.c.l.b16 %v62
  %v218 = vunpack.c.l.b16 %v63
  %v219 = vunpack.c.l.b16 %v64
  %v220 = vunpack.c.l.b16 %v65
  %v221 = vunpack.c.l.b16 %v66
  %v222 = vunpack.c.l.b16 %v67
  %v223 = vunpack.c.l.b16 %v68
  %v224 = vunpack.c.l.b16 %v69
  %v225 = vunpack.c.l.b16 %v70
  %v226 = vunpack.c.l.b16 %v71
  %v227 = vunpack.c.l.b16 %v72
  %v228 = vunpack.c.l.b16 %v73
  %v229 = vunpack.c.l.b16 %v74
  %v230 = vunpack.c.l.b16 %v75
  %v231 = vunpack.c.l.b16 %v76
  %v232 = vunpack.c.l.b16 %v77
  %v233 = vunpack.c.l.b16 %v78
  %v234 = vunpack.c.l.b16 %v79
  %v235 = vunpack.c.l.b16 %v80
  %v236 = vunpack.c.l.b16 %v81
  %v237 = vunpack.c.l.b16 %v82
  %v238 = vunpack.c.l.b16 %v83
  %v239 = vunpack.c.l.b16 %v84
  %v240 = vunpack.c.l.b16 %v85
  %v241 = vunpack.c.l.b16 %v86
  %v242 = vunpack.c.l.b16 %v87
  %v243 = vunpack.c.l.b16 %v88
  %v244 = vunpack.c.l.b16 %v89
  %v245 = vunpack.c.l.b16 %v90
  %v246 = vunpack.c.l.b16 %v91
  %v247 = vunpack.c.l.b16 %v92
  %v248 = vunpack.c.l.b16 %v93
  %v249 = vunpack.c.l.b16 %v94
  %v250 = vpack.c.b16 %v187, %v186
  %v251 = vpack.c.b16 %v189, %v188
  %v252 = vpack.c.b16 %v191, %v190
  %v253 = vpack.c.b16 %v193, %v192
  %v254 = vpack.c.b16 %v195, %v194
  %v255 = vpack.c.b16 %v197, %v196
  %v256 = vpack.c.b16 %v199, %v198
  %v257 = vpack.c.b16 %v201, %v200
  %v258 = vpack.c.b16 %v203, %v202
  %v259 = vpack.c.b16 %v205, %v204
  %v260 = vpack.c.b16 %v207, %v206
  %v261 = vpack.c.b16 %v209, %v208
  %v262 = vpack.c.b16 %v211, %v210
  %v263 = vpack.c.b16 %v213, %v212
  %v264 = vpack.c.b16 %v215, %v214
  %v265 = vpack.c.b16 %v217, %v216
  %v266 = vpack.c.b16 %v219, %v218
  %v267 = vpack.c.b16 %v221, %v220
  %v268 = vpack.c.b16 %v223, %v222
  %v269 = vpack.c.b16 %v225, %v224
  %v270 = vpack.c.b16 %v227, %v226
  %v271 = vpack.c.b16 %v229, %v228
  %v272 = vpack.c.b16 %v231, %v230
  %v273 = vpack.c.b16 %v233, %v232
  %v274 = vpack.c.b16 %v235, %v234
  %v275 = vpack.c.b16 %v237, %v236
  %v276 = vpack.c.b16 %v239, %v238
  %v277 = vpack.c.b16 %v241, %v240
  %v278 = vpack.c.b16 %v243, %v242
  %v279 = vpack.c.b16 %v245, %v244
  %v280 = vpack.c.b16 %v247, %v246
  %v281 = vpack.c.b16 %v249, %v248
  %314 = vmatprep.subr.bf16.mxu0 0
  %315 = vmatpush1.bf16.msra.mxu0 %v257
  %316 = vmatprep.subr.bf16.mxu0 0
  %317 = vmatpush1.bf16.msra.mxu0 %v256
  %318 = vmatprep.subr.bf16.mxu0 0
  %319 = vmatpush1.bf16.msra.mxu0 %v255
  %320 = vmatprep.subr.bf16.mxu0 0
  %321 = vmatpush1.bf16.msra.mxu0 %v254
  %322 = vmatprep.subr.bf16.mxu0 0
  %323 = vmatpush1.bf16.msra.mxu0 %v253
  %324 = vmatprep.subr.bf16.mxu0 0
  %325 = vmatpush1.bf16.msra.mxu0 %v252
  %326 = vmatprep.subr.bf16.mxu0 0
  %327 = vmatpush1.bf16.msra.mxu0 %v251
  %328 = vmatprep.subr.bf16.mxu0 0
  %329 = vmatpush1.bf16.msra.mxu0 %v250
  %330 = vmatprep.subr.bf16.mxu0 0
  %331 = vmatpush2.bf16.msra.mxu0 %v265
  %332 = vmatprep.subr.bf16.mxu0 0
  %333 = vmatpush2.bf16.msra.mxu0 %v264
  %334 = vmatprep.subr.bf16.mxu0 0
  %335 = vmatpush2.bf16.msra.mxu0 %v263
  %336 = vmatprep.subr.bf16.mxu0 0
  %337 = vmatpush2.bf16.msra.mxu0 %v262
  %338 = vmatprep.subr.bf16.mxu0 0
  %339 = vmatpush2.bf16.msra.mxu0 %v261
  %340 = vmatprep.subr.bf16.mxu0 0
  %341 = vmatpush2.bf16.msra.mxu0 %v260
  %342 = vmatprep.subr.bf16.mxu0 0
  %343 = vmatpush2.bf16.msra.mxu0 %v259
  %344 = vmatprep.subr.bf16.mxu0 0
  %345 = vmatpush2.bf16.msra.mxu0 %v258
  %346 = vmatprep.mubr.bf16.mxu0 %v115
  %347 = vmatmul.mubr.bf16.gmra.mxu0 %v114
  %v348 = vpop.f32.mrf.mxu0
  %v349 = vadd.f32 %v100, %v348
  %v350 = vpop.f32.mrf.mxu0
  %v351 = vpop.f32.mrf.mxu0
  %v352 = vadd.f32 %v100, %v351
  %v353 = vpop.f32.mrf.mxu0
  %354 = vdwg.mxu0
  %355 = vmatprep.subr.bf16.mxu0 0
  %356 = vmatpush1.bf16.msra.mxu0 %v273
  %357 = vmatprep.subr.bf16.mxu0 0
  %358 = vmatpush1.bf16.msra.mxu0 %v272
  %359 = vmatprep.subr.bf16.mxu0 0
  %360 = vmatpush1.bf16.msra.mxu0 %v271
  %361 = vmatprep.subr.bf16.mxu0 0
  %362 = vmatpush1.bf16.msra.mxu0 %v270
  %363 = vmatprep.subr.bf16.mxu0 0
  %364 = vmatpush1.bf16.msra.mxu0 %v269
  %365 = vmatprep.subr.bf16.mxu0 0
  %366 = vmatpush1.bf16.msra.mxu0 %v268
  %367 = vmatprep.subr.bf16.mxu0 0
  %368 = vmatpush1.bf16.msra.mxu0 %v267
  %369 = vmatprep.subr.bf16.mxu0 0
  %370 = vmatpush1.bf16.msra.mxu0 %v266
  %371 = vmatprep.subr.bf16.mxu0 0
  %372 = vmatpush2.bf16.msra.mxu0 %v281
  %373 = vmatprep.subr.bf16.mxu0 0
  %374 = vmatpush2.bf16.msra.mxu0 %v280
  %375 = vmatprep.subr.bf16.mxu0 0
  %376 = vmatpush2.bf16.msra.mxu0 %v279
  %377 = vmatprep.subr.bf16.mxu0 0
  %378 = vmatpush2.bf16.msra.mxu0 %v278
  %379 = vmatprep.subr.bf16.mxu0 0
  %380 = vmatpush2.bf16.msra.mxu0 %v277
  %381 = vmatprep.subr.bf16.mxu0 0
  %382 = vmatpush2.bf16.msra.mxu0 %v276
  %383 = vmatprep.subr.bf16.mxu0 0
  %384 = vmatpush2.bf16.msra.mxu0 %v275
  %385 = vmatprep.subr.bf16.mxu0 0
  %386 = vmatpush2.bf16.msra.mxu0 %v274
  %387 = vmatprep.mubr.bf16.mxu0 %v117
  %388 = vmatmul.mubr.bf16.gmra.mxu0 %v116
  %v389 = vpop.f32.mrf.mxu0
  %v390 = vadd.f32 %v349, %v389
  %v391 = vpop.f32.mrf.mxu0
  %v392 = vpop.f32.mrf.mxu0
  %v393 = vadd.f32 %v352, %v392
  %v394 = vpop.f32.mrf.mxu0
  %395 = vdwg.mxu0
  %v396 = vmax.f32 %v390, 0.0
  %v397 = vmax.f32 %v393, 0.0
  %v398 = vpack.c.bf16 %v397, %v396
  %v399 = vld [vmem:[%s3] sm:$0xf]
  %v400 = vld [vmem:[%s3 + $0x4] sm:$0xf]
  %v401 = vld [vmem:[%s3 + $0x8] sm:$0xf]
  %v402 = vld [vmem:[%s3 + $0xc] sm:$0xf]
  %v403 = vld [vmem:[%s3 + $0x10] sm:$0xf]
  %v404 = vld [vmem:[%s3 + $0x14] sm:$0xf]
  %v405 = vld [vmem:[%s3 + $0x18] sm:$0xf]
  %v406 = vld [vmem:[%s3 + $0x1c] sm:$0xf]
  %v407 = vld [vmem:[%s3 + $0x20] sm:$0xf]
  %v408 = vld [vmem:[%s3 + $0x24] sm:$0xf]
  %v409 = vld [vmem:[%s3 + $0x28] sm:$0xf]
  %v410 = vld [vmem:[%s3 + $0x2c] sm:$0xf]
  %v411 = vld [vmem:[%s3 + $0x30] sm:$0xf]
  %v412 = vld [vmem:[%s3 + $0x34] sm:$0xf]
  %v413 = vld [vmem:[%s3 + $0x38] sm:$0xf]
  %v414 = vld [vmem:[%s3 + $0x3c] sm:$0xf]
  %v415 = vld [vmem:[%s4] sm:$0x1]
  %v417 = vlaneseq
  %v418 = vshrl.u32 %v417, 7
  %v419 = vsub.s32 0, %v418
  %v420 = vrot.slane %v415, %v419
  %v438 = vunpack.c.l.b16 %v399
  %v439 = vunpack.c.l.b16 %v400
  %v440 = vunpack.c.l.b16 %v401
  %v441 = vunpack.c.l.b16 %v402
  %v442 = vunpack.c.l.b16 %v403
  %v443 = vunpack.c.l.b16 %v404
  %v444 = vunpack.c.l.b16 %v405
  %v445 = vunpack.c.l.b16 %v406
  %v446 = vunpack.c.l.b16 %v407
  %v447 = vunpack.c.l.b16 %v408
  %v448 = vunpack.c.l.b16 %v409
  %v449 = vunpack.c.l.b16 %v410
  %v450 = vunpack.c.l.b16 %v411
  %v451 = vunpack.c.l.b16 %v412
  %v452 = vunpack.c.l.b16 %v413
  %v453 = vunpack.c.l.b16 %v414
  %v454 = vpack.c.b16 %v439, %v438
  %v455 = vpack.c.b16 %v441, %v440
  %v456 = vpack.c.b16 %v443, %v442
  %v457 = vpack.c.b16 %v445, %v444
  %v458 = vpack.c.b16 %v447, %v446
  %v459 = vpack.c.b16 %v449, %v448
  %v460 = vpack.c.b16 %v451, %v450
  %v461 = vpack.c.b16 %v453, %v452
  %470 = vmatprep.subr.bf16.mxu0 0
  %471 = vmatpush1.bf16.msra.mxu0 %v461
  %472 = vmatprep.subr.bf16.mxu0 0
  %473 = vmatpush1.bf16.msra.mxu0 %v460
  %474 = vmatprep.subr.bf16.mxu0 0
  %475 = vmatpush1.bf16.msra.mxu0 %v459
  %476 = vmatprep.subr.bf16.mxu0 0
  %477 = vmatpush1.bf16.msra.mxu0 %v458
  %478 = vmatprep.subr.bf16.mxu0 0
  %479 = vmatpush1.bf16.msra.mxu0 %v457
  %480 = vmatprep.subr.bf16.mxu0 0
  %481 = vmatpush1.bf16.msra.mxu0 %v456
  %482 = vmatprep.subr.bf16.mxu0 0
  %483 = vmatpush1.bf16.msra.mxu0 %v455
  %484 = vmatprep.subr.bf16.mxu0 0
  %485 = vmatpush1.bf16.msra.mxu0 %v454
  %486 = vmatprep.subr.bf16.mxu0 0
  %487 = vmatpush2.bf16.msra.mxu0 0
  %488 = vmatprep.subr.bf16.mxu0 0
  %489 = vmatpush2.bf16.msra.mxu0 0
  %490 = vmatprep.subr.bf16.mxu0 0
  %491 = vmatpush2.bf16.msra.mxu0 0
  %492 = vmatprep.subr.bf16.mxu0 0
  %493 = vmatpush2.bf16.msra.mxu0 0
  %494 = vmatprep.subr.bf16.mxu0 0
  %495 = vmatpush2.bf16.msra.mxu0 0
  %496 = vmatprep.subr.bf16.mxu0 0
  %497 = vmatpush2.bf16.msra.mxu0 0
  %498 = vmatprep.subr.bf16.mxu0 0
  %499 = vmatpush2.bf16.msra.mxu0 0
  %500 = vmatprep.subr.bf16.mxu0 0
  %501 = vmatpush2.bf16.msra.mxu0 0
  %502 = vmatprep.mubr.bf16.mxu0 0
  %503 = vmatmul.mubr.bf16.gmra.mxu0 %v398
  %v504 = vpop.f32.mrf.mxu0
  %v505 = vadd.f32 %v420, %v504
  %v506 = vpop.f32.mrf.mxu0
  %v507 = vpop.f32.mrf.mxu0
  %v508 = vadd.f32 %v420, %v507
  %v509 = vpop.f32.mrf.mxu0
  %510 = vdwg.mxu0
  %v511 = vmax.f32 %v505, 0.0
  %v512 = vmax.f32 %v508, 0.0
  %v513 = vpack.c.bf16 %v512, %v511
  %v514 = vld [vmem:[%s5] sm:$0xf]
  %v515 = vld [vmem:[%s5 + $0x4] sm:$0xf]
  %v516 = vld [vmem:[%s5 + $0x8] sm:$0xf]
  %v517 = vld [vmem:[%s5 + $0xc] sm:$0xf]
  %v518 = vld [vmem:[%s5 + $0x10] sm:$0xf]
  %v519 = vld [vmem:[%s5 + $0x14] sm:$0xf]
  %v520 = vld [vmem:[%s5 + $0x18] sm:$0xf]
  %v521 = vld [vmem:[%s5 + $0x1c] sm:$0xf]
  %v522 = vld [vmem:[%s5 + $0x20] sm:$0xf]
  %v523 = vld [vmem:[%s5 + $0x24] sm:$0xf]
  %v524 = vld [vmem:[%s5 + $0x28] sm:$0xf]
  %v525 = vld [vmem:[%s5 + $0x2c] sm:$0xf]
  %v526 = vld [vmem:[%s5 + $0x30] sm:$0xf]
  %v527 = vld [vmem:[%s5 + $0x34] sm:$0xf]
  %v528 = vld [vmem:[%s5 + $0x38] sm:$0xf]
  %v529 = vld [vmem:[%s5 + $0x3c] sm:$0xf]
  %v530 = vld [vmem:[%s6] sm:$0x1]
  %v532 = vlaneseq
  %v533 = vshrl.u32 %v532, 7
  %v534 = vsub.s32 0, %v533
  %v535 = vrot.slane %v530, %v534
  %v553 = vunpack.c.l.b16 %v514
  %v554 = vunpack.c.l.b16 %v515
  %v555 = vunpack.c.l.b16 %v516
  %v556 = vunpack.c.l.b16 %v517
  %v557 = vunpack.c.l.b16 %v518
  %v558 = vunpack.c.l.b16 %v519
  %v559 = vunpack.c.l.b16 %v520
  %v560 = vunpack.c.l.b16 %v521
  %v561 = vunpack.c.l.b16 %v522
  %v562 = vunpack.c.l.b16 %v523
  %v563 = vunpack.c.l.b16 %v524
  %v564 = vunpack.c.l.b16 %v525
  %v565 = vunpack.c.l.b16 %v526
  %v566 = vunpack.c.l.b16 %v527
  %v567 = vunpack.c.l.b16 %v528
  %v568 = vunpack.c.l.b16 %v529
  %v569 = vpack.c.b16 %v554, %v553
  %v570 = vpack.c.b16 %v556, %v555
  %v571 = vpack.c.b16 %v558, %v557
  %v572 = vpack.c.b16 %v560, %v559
  %v573 = vpack.c.b16 %v562, %v561
  %v574 = vpack.c.b16 %v564, %v563
  %v575 = vpack.c.b16 %v566, %v565
  %v576 = vpack.c.b16 %v568, %v567
  %585 = vmatprep.subr.bf16.mxu0 0
  %586 = vmatpush1.bf16.msra.mxu0 %v576
  %587 = vmatprep.subr.bf16.mxu0 0
  %588 = vmatpush1.bf16.msra.mxu0 %v575
  %589 = vmatprep.subr.bf16.mxu0 0
  %590 = vmatpush1.bf16.msra.mxu0 %v574
  %591 = vmatprep.subr.bf16.mxu0 0
  %592 = vmatpush1.bf16.msra.mxu0 %v573
  %593 = vmatprep.subr.bf16.mxu0 0
  %594 = vmatpush1.bf16.msra.mxu0 %v572
  %595 = vmatprep.subr.bf16.mxu0 0
  %596 = vmatpush1.bf16.msra.mxu0 %v571
  %597 = vmatprep.subr.bf16.mxu0 0
  %598 = vmatpush1.bf16.msra.mxu0 %v570
  %599 = vmatprep.subr.bf16.mxu0 0
  %600 = vmatpush1.bf16.msra.mxu0 %v569
  %601 = vmatprep.subr.bf16.mxu0 0
  %602 = vmatpush2.bf16.msra.mxu0 0
  %603 = vmatprep.subr.bf16.mxu0 0
  %604 = vmatpush2.bf16.msra.mxu0 0
  %605 = vmatprep.subr.bf16.mxu0 0
  %606 = vmatpush2.bf16.msra.mxu0 0
  %607 = vmatprep.subr.bf16.mxu0 0
  %608 = vmatpush2.bf16.msra.mxu0 0
  %609 = vmatprep.subr.bf16.mxu0 0
  %610 = vmatpush2.bf16.msra.mxu0 0
  %611 = vmatprep.subr.bf16.mxu0 0
  %612 = vmatpush2.bf16.msra.mxu0 0
  %613 = vmatprep.subr.bf16.mxu0 0
  %614 = vmatpush2.bf16.msra.mxu0 0
  %615 = vmatprep.subr.bf16.mxu0 0
  %616 = vmatpush2.bf16.msra.mxu0 0
  %617 = vmatprep.mubr.bf16.mxu0 0
  %618 = vmatmul.mubr.bf16.gmra.mxu0 %v513
  %v619 = vpop.f32.mrf.mxu0
  %v620 = vadd.f32 %v535, %v619
  %v621 = vpop.f32.mrf.mxu0
  %v622 = vpop.f32.mrf.mxu0
  %v623 = vadd.f32 %v535, %v622
  %v624 = vpop.f32.mrf.mxu0
  %625 = vdwg.mxu0
  %v626 = vlaneseq
  %v627 = vand.u32 %v626, 127
  %vm628 = vcmp.lt.s32.totalorder %v627, 10
  %v629 = vsel %vm628, %v620, -1e+30
  %v630 = vsel %vm628, %v623, -1e+30
  %631 = vmax.xlane.f32.xlu0 %v629
  %v632 = vpop.xlane.xlu0 %631
  %633 = vmax.xlane.f32.xlu0 %v630
  %v634 = vpop.xlane.xlu0 %633
  %v635 = vsub.f32 %v629, %v632
  %v636 = vsub.f32 %v630, %v634
  %v637 = vmul.f32 %v635, 1.442695
  %v638 = vpow.pop %v637
  %v639 = vmul.f32 %v636, 1.442695
  %v640 = vpow.pop %v639
  %641 = vadd.xlane.f32.xlu0 %v638
  %v642 = vpop.xlane.xlu0 %641
  %643 = vadd.xlane.f32.xlu0 %v640
  %v644 = vpop.xlane.xlu0 %643
  %v645 = vrcp.pop %v642
  %v646 = vmul.f32 %v638, %v645
  %v647 = vrcp.pop %v644
  %v648 = vmul.f32 %v640, %v647
  %649 = vst [vmem:[%s7] sm:$0xff] %v646
  %650 = vst [vmem:[%s7 + $0x8] sm:$0xff] %v648
  // Predicated region
  $region30: #{lenet_forward.5} parent=0 // pred_check
    _
  $region31: #{lenet_forward.5} parent=0 // pred_check_branch
    %652 = sbr.rel (0) target = $region33
  $region32: #{lenet_forward.5} parent=0 // pred_region
    _
  $region33: #{lenet_forward.5} parent=0 // pred_fallthru
    _
  // Predicated region
  $region34: #{lenet_forward.5} parent=0 // pred_check
    _
  $region35: #{lenet_forward.5} parent=0 // pred_check_branch
    %654 = sbr.rel (0) target = $region37
  $region36: #{lenet_forward.5} parent=0 // pred_region
    _
  $region37: #{lenet_forward.5} parent=0 // pred_fallthru
    _

</llo_original>
